<compile_context>
chip_gen: v6e
topology: v6e:2x2x1
jax: 0.10.0
libtpu: 0.0.40
codegen_flags: <defaults>
</compile_context>

<pallas_src>
import functools

import numpy as np
import jax
import jax.numpy as jnp
from jax.experimental import pallas as pl
from jax.experimental.pallas import tpu as pltpu


# ----------------------------------------------------------------------------
# Helpers (static, wrapper-side)
# ----------------------------------------------------------------------------
def _ceil_to(v, m):
    return ((v + m - 1) // m) * m


def _conv_out(h):
    # Conv2d(kernel=3, stride=2, padding=1): out = floor((h + 2 - 3)/2) + 1
    return (h - 1) // 2 + 1


def _build_gather_matrix(h_in, w_in, h_out, w_out, mp_in, mp_out):
    """0/1 matrix S of shape (9*mp_out, mp_in).

    Row t*mp_out + (yo*w_out + xo) selects input position (2*yo+dy-1, 2*xo+dx-1)
    for tap t = dy*3 + dx; out-of-bounds taps (zero padding) stay all-zero.
    Applying S to the (mp_in, C) activation matrix performs the full im2col
    gather for a 3x3 stride-2 pad-1 conv as a single matmul.
    """
    s = np.zeros((9 * mp_out, mp_in), np.float32)
    for dy in range(3):
        for dx in range(3):
            t = dy * 3 + dx
            for yo in range(h_out):
                for xo in range(w_out):
                    yi = 2 * yo + dy - 1
                    xi = 2 * xo + dx - 1
                    if 0 <= yi < h_in and 0 <= xi < w_in:
                        s[t * mp_out + yo * w_out + xo, yi * w_in + xi] = 1.0
    return s


# ----------------------------------------------------------------------------
# Fused encoder kernel (all conv layers in one pallas_call)
# ----------------------------------------------------------------------------
def _encoder_kernel(*refs, num_layers, Bt):
    # refs = [cols1, w1, b1, (S_l, W_l, b_l) for each layer >= 2 ..., out]
    out_ref = refs[-1]
    cols_ref, w1_ref, b1_ref = refs[0], refs[1], refs[2]
    extra = refs[3:-1]

    for bi in range(Bt):                       # static unroll over batch chunk
        # ---- layer 1: pre-im2col'd operand, single MXU matmul ----
        h = jnp.dot(cols_ref[bi], w1_ref[...],
                    preferred_element_type=jnp.float32)     # (M1p, 128) f32
        h = h + b1_ref[...]

        # ---- layers 2..n: S-gather matmul + 9 per-tap matmuls, VMEM-resident ----
        for li in range(num_layers - 1):
            # activation of previous (hidden) layer: ReLU, bf16 operands
            h = jnp.maximum(h, 0.0).astype(jnp.bfloat16)

            s_ref = extra[3 * li]
            w_ref = extra[3 * li + 1]
            b_ref = extra[3 * li + 2]
            ntaps, cp_in, cp_out = w_ref.shape
            mp_out = s_ref.shape[0] // ntaps

            # im2col gather as one matmul (S is 0/1 -> exact row selection)
            g = jnp.dot(s_ref[...], h,
                        preferred_element_type=jnp.float32)  # (9*mp_out, 128)
            g = g.astype(jnp.bfloat16)                        # exact (copies of bf16)

            acc = jnp.zeros((mp_out, cp_out), jnp.float32)
            for t in range(ntaps):                            # aligned static slices
                acc = acc + jnp.dot(g[t * mp_out:(t + 1) * mp_out, :], w_ref[t],
                                    preferred_element_type=jnp.float32)
            h = acc + b_ref[...]                              # f32 epilogue

        # lane-dense (128-wide) f32 store of the final latent slab
        out_ref[bi] = h


# ----------------------------------------------------------------------------
# Encoder forward (NCHW in / NCHW out, like the PyTorch module)
# ----------------------------------------------------------------------------
def encoder_forward(x_nchw, params):
    B, c_in, H, W = x_nchw.shape
    num_layers = len(params)

    # spatial sizes before/after each conv
    sizes = [(H, W)]
    for _ in range(num_layers):
        h, w = sizes[-1]
        sizes.append((_conv_out(h), _conv_out(w)))

    c_outs = [p[0].shape[0] for p in params]
    cps = [_ceil_to(max(c, 128), 128) for c in c_outs]        # lane-padded channels
    mps = [_ceil_to(h * w, 8) for (h, w) in sizes[1:]]        # sublane-padded rows

    x = jnp.transpose(x_nchw, (0, 2, 3, 1))                   # NHWC (channels->lanes)

    # ---- layer 1: wrapper-side im2col, K padded to a multiple of 128 ----
    H1, W1 = sizes[1]
    M1, M1p = H1 * W1, mps[0]
    K1 = 9 * c_in
    K1p = _ceil_to(max(K1, 128), 128)
    xp = jnp.pad(x, ((0, 0), (1, 1), (1, 1), (0, 0)))
    taps = []
    for dy in range(3):
        for dx in range(3):
            taps.append(xp[:, dy::2, dx::2, :][:, :H1, :W1, :])
    cols1 = jnp.concatenate(taps, axis=-1).reshape(B, M1, K1)
    cols1 = jnp.pad(cols1, ((0, 0), (0, M1p - M1), (0, K1p - K1)))
    cols1 = cols1.astype(jnp.bfloat16)

    w1, b1 = params[0]
    c1 = c_outs[0]
    w1_mat = jnp.transpose(w1, (2, 3, 1, 0)).reshape(K1, c1)   # row = tap*Cin + cin
    w1_mat = jnp.pad(w1_mat, ((0, K1p - K1), (0, cps[0] - c1))).astype(jnp.bfloat16)
    b1_row = jnp.pad(b1.reshape(1, c1), ((0, 0), (0, cps[0] - c1))).astype(jnp.float32)

    inputs = [cols1, w1_mat, b1_row]
    in_specs = [
        None,  # cols1 spec set below (needs Bt)
        pl.BlockSpec((K1p, cps[0]), lambda i: (0, 0)),
        pl.BlockSpec((1, cps[0]), lambda i: (0, 0)),
    ]

    # ---- layers 2..n: static gather matrix + per-tap weight stacks ----
    for li in range(1, num_layers):
        h_in, w_in = sizes[li]
        h_out, w_out = sizes[li + 1]
        mp_in, mp_out = mps[li - 1], mps[li]
        cp_in, cp_out = cps[li - 1], cps[li]
        cin_l, cout_l = c_outs[li - 1], c_outs[li]

        s = jnp.asarray(
            _build_gather_matrix(h_in, w_in, h_out, w_out, mp_in, mp_out),
            dtype=jnp.bfloat16)
        w_l, b_l = params[li]
        w_taps = jnp.transpose(w_l, (2, 3, 1, 0)).reshape(9, cin_l, cout_l)
        w_taps = jnp.pad(w_taps, ((0, 0), (0, cp_in - cin_l), (0, cp_out - cout_l)))
        w_taps = w_taps.astype(jnp.bfloat16)
        b_row = jnp.pad(b_l.reshape(1, cout_l),
                        ((0, 0), (0, cp_out - cout_l))).astype(jnp.float32)

        inputs += [s, w_taps, b_row]
        in_specs += [
            pl.BlockSpec((9 * mp_out, mp_in), lambda i: (0, 0)),
            pl.BlockSpec((9, cp_in, cp_out), lambda i: (0, 0, 0)),
            pl.BlockSpec((1, cp_out), lambda i: (0, 0)),
        ]

    # ---- batch chunking: >=2 grid steps when B>=2 so both v7x TCs get work ----
    Bt = max(1, min(8, B // 2)) if B > 1 else 1
    grid = (pl.cdiv(B, Bt),)
    in_specs[0] = pl.BlockSpec((Bt, M1p, K1p), lambda i: (i, 0, 0))

    mp_last, cp_last = mps[-1], cps[-1]
    out = pl.pallas_call(
        functools.partial(_encoder_kernel, num_layers=num_layers, Bt=Bt),
        out_shape=jax.ShapeDtypeStruct((B, mp_last, cp_last), jnp.float32),
        grid=grid,
        in_specs=in_specs,
        out_specs=pl.BlockSpec((Bt, mp_last, cp_last), lambda i: (i, 0, 0)),
        compiler_params=pltpu.CompilerParams(dimension_semantics=("parallel",)),
    )(*inputs)

    Hn, Wn = sizes[-1]
    cn = c_outs[-1]
    y = out[:, :Hn * Wn, :cn].reshape(B, Hn, Wn, cn)
    return jnp.transpose(y, (0, 3, 1, 2))                      # NHWC -> NCHW


# ----------------------------------------------------------------------------
# Reference (XLA conv) with the same bf16-operand / f32-accumulate recipe
# ----------------------------------------------------------------------------
def encoder_ref(x_nchw, params):
    x = x_nchw
    n = len(params)
    for idx, (w, b) in enumerate(params):
        y = jax.lax.conv_general_dilated(
            x.astype(jnp.bfloat16), w.astype(jnp.bfloat16),
            window_strides=(2, 2), padding=((1, 1), (1, 1)),
            dimension_numbers=("NCHW", "OIHW", "NCHW"),
            preferred_element_type=jnp.float32)
        y = y + b[None, :, None, None]
        if idx < n - 1:
            y = jnp.maximum(y, 0.0)
        x = y
    return x


def init_encoder_params(key, layers, latent_dim):
    """Deterministic synthetic init. Conv weights in PyTorch OIHW layout."""
    params = []
    in_ch = layers[0]
    for out_ch in list(layers[1:]) + [latent_dim]:
        key, kw, kb = jax.random.split(key, 3)
        w = jax.random.normal(kw, (out_ch, in_ch, 3, 3), jnp.float32) / np.sqrt(9 * in_ch)
        b = 0.01 * jax.random.normal(kb, (out_ch,), jnp.float32)
        params.append((w, b))
        in_ch = out_ch
    return params


if __name__ == "__main__":
    # Encoder(layers=[4, 8], latent_dim=16):
    #   conv(4->8, s2) -> ReLU -> conv(8->16, s2)   (no activation at the end)
    layers = [4, 8]
    latent_dim = 16
    B, H, W = 2, 16, 16

    key = jax.random.PRNGKey(0)
    key, kx = jax.random.split(key)
    x = jax.random.normal(kx, (B, layers[0], H, W), jnp.float32)     # NCHW input
    params = init_encoder_params(key, layers, latent_dim)

    fwd = jax.jit(encoder_forward)
    out = jax.block_until_ready(fwd(x, params))
    assert out.shape == (B, latent_dim, H // 4, W // 4), out.shape

    ref = jax.block_until_ready(encoder_ref(x, params))
    np.testing.assert_allclose(np.asarray(out), np.asarray(ref), rtol=1e-2, atol=1e-3)

    print("KERNEL_OK")
</pallas_src>

<mosaic_0001>
module attributes {stable_mosaic.version = 11 : i64} {
  func.func @_encoder_kernel(%arg0: i32, %arg1: memref<1x64x128xbf16, #tpu.memory_space<vmem>>, %arg2: memref<128x128xbf16, #tpu.memory_space<vmem>>, %arg3: memref<1x128xf32, #tpu.memory_space<vmem>>, %arg4: memref<144x64xbf16, #tpu.memory_space<vmem>>, %arg5: memref<9x128x128xbf16, #tpu.memory_space<vmem>>, %arg6: memref<1x128xf32, #tpu.memory_space<vmem>>, %arg7: memref<1x16x128xf32, #tpu.memory_space<vmem>>) attributes {dimension_semantics = [#tpu.dimension_semantics<parallel>], iteration_bounds = array<i64: 2>, scalar_prefetch = 0 : i64, scratch_operands = 0 : i64, tpu.core_type = #tpu.core_type<tc>, window_params = [{transform_indices = @transform_0, window_bounds = array<i64: 1, 64, 128>}, {pipeline_mode = #tpu.pipeline_mode<synchronous>, transform_indices = @transform_1, window_bounds = array<i64: 128, 128>}, {pipeline_mode = #tpu.pipeline_mode<synchronous>, transform_indices = @transform_2, window_bounds = array<i64: 1, 128>}, {pipeline_mode = #tpu.pipeline_mode<synchronous>, transform_indices = @transform_3, window_bounds = array<i64: 144, 64>}, {pipeline_mode = #tpu.pipeline_mode<synchronous>, transform_indices = @transform_4, window_bounds = array<i64: 9, 128, 128>}, {pipeline_mode = #tpu.pipeline_mode<synchronous>, transform_indices = @transform_5, window_bounds = array<i64: 1, 128>}, {transform_indices = @transform_6, window_bounds = array<i64: 1, 16, 128>}]} {
    %c0 = arith.constant 0 : index
    %c0_0 = arith.constant 0 : index
    %c0_1 = arith.constant 0 : index
    %0 = vector.load %arg1[%c0, %c0_0, %c0_1] : memref<1x64x128xbf16, #tpu.memory_space<vmem>>, vector<1x64x128xbf16>
    %1 = vector.shape_cast %0 : vector<1x64x128xbf16> to vector<64x128xbf16>
    %c0_2 = arith.constant 0 : index
    %c0_3 = arith.constant 0 : index
    %2 = vector.load %arg2[%c0_2, %c0_3] : memref<128x128xbf16, #tpu.memory_space<vmem>>, vector<128x128xbf16>
    %cst = arith.constant dense<0.000000e+00> : vector<64x128xf32>
    %3 = tpu.matmul %1, %2, %cst {dimension_numbers = #tpu.dot_dimension_numbers<[1], [0], [0], [1], [0, 0, 1, 1], [], []>} : vector<64x128xbf16>, vector<128x128xbf16>, vector<64x128xf32> -> vector<64x128xf32>
    %c0_4 = arith.constant 0 : index
    %c0_5 = arith.constant 0 : index
    %4 = vector.load %arg3[%c0_4, %c0_5] : memref<1x128xf32, #tpu.memory_space<vmem>>, vector<1x128xf32>
    %5 = vector.broadcast %4 : vector<1x128xf32> to vector<64x128xf32>
    %6 = arith.addf %3, %5 : vector<64x128xf32>
    %cst_6 = arith.constant 0.000000e+00 : f32
    %7 = vector.broadcast %cst_6 : f32 to vector<64x128xf32>
    %8 = arith.maximumf %6, %7 : vector<64x128xf32>
    %9 = arith.truncf %8 : vector<64x128xf32> to vector<64x128xbf16>
    %c0_7 = arith.constant 0 : index
    %c0_8 = arith.constant 0 : index
    %10 = vector.load %arg4[%c0_7, %c0_8] : memref<144x64xbf16, #tpu.memory_space<vmem>>, vector<144x64xbf16>
    %cst_9 = arith.constant dense<0.000000e+00> : vector<144x128xf32>
    %11 = tpu.matmul %10, %9, %cst_9 {dimension_numbers = #tpu.dot_dimension_numbers<[1], [0], [0], [1], [0, 0, 1, 1], [], []>} : vector<144x64xbf16>, vector<64x128xbf16>, vector<144x128xf32> -> vector<144x128xf32>
    %12 = arith.truncf %11 : vector<144x128xf32> to vector<144x128xbf16>
    %cst_10 = arith.constant 0.000000e+00 : f32
    %13 = vector.broadcast %cst_10 : f32 to vector<16x128xf32>
    %14 = vector.extract_strided_slice %12 {offsets = [0, 0], sizes = [16, 128], strides = [1, 1]} : vector<144x128xbf16> to vector<16x128xbf16>
    %c0_11 = arith.constant 0 : index
    %c0_12 = arith.constant 0 : index
    %c0_13 = arith.constant 0 : index
    %15 = vector.load %arg5[%c0_11, %c0_12, %c0_13] : memref<9x128x128xbf16, #tpu.memory_space<vmem>>, vector<1x128x128xbf16>
    %16 = vector.shape_cast %15 : vector<1x128x128xbf16> to vector<128x128xbf16>
    %cst_14 = arith.constant dense<0.000000e+00> : vector<16x128xf32>
    %17 = tpu.matmul %14, %16, %cst_14 {dimension_numbers = #tpu.dot_dimension_numbers<[1], [0], [0], [1], [0, 0, 1, 1], [], []>} : vector<16x128xbf16>, vector<128x128xbf16>, vector<16x128xf32> -> vector<16x128xf32>
    %18 = arith.addf %13, %17 : vector<16x128xf32>
    %19 = vector.extract_strided_slice %12 {offsets = [16, 0], sizes = [16, 128], strides = [1, 1]} : vector<144x128xbf16> to vector<16x128xbf16>
    %c1 = arith.constant 1 : index
    %c0_15 = arith.constant 0 : index
    %c0_16 = arith.constant 0 : index
    %20 = vector.load %arg5[%c1, %c0_15, %c0_16] : memref<9x128x128xbf16, #tpu.memory_space<vmem>>, vector<1x128x128xbf16>
    %21 = vector.shape_cast %20 : vector<1x128x128xbf16> to vector<128x128xbf16>
    %cst_17 = arith.constant dense<0.000000e+00> : vector<16x128xf32>
    %22 = tpu.matmul %19, %21, %cst_17 {dimension_numbers = #tpu.dot_dimension_numbers<[1], [0], [0], [1], [0, 0, 1, 1], [], []>} : vector<16x128xbf16>, vector<128x128xbf16>, vector<16x128xf32> -> vector<16x128xf32>
    %23 = arith.addf %18, %22 : vector<16x128xf32>
    %24 = vector.extract_strided_slice %12 {offsets = [32, 0], sizes = [16, 128], strides = [1, 1]} : vector<144x128xbf16> to vector<16x128xbf16>
    %c2 = arith.constant 2 : index
    %c0_18 = arith.constant 0 : index
    %c0_19 = arith.constant 0 : index
    %25 = vector.load %arg5[%c2, %c0_18, %c0_19] : memref<9x128x128xbf16, #tpu.memory_space<vmem>>, vector<1x128x128xbf16>
    %26 = vector.shape_cast %25 : vector<1x128x128xbf16> to vector<128x128xbf16>
    %cst_20 = arith.constant dense<0.000000e+00> : vector<16x128xf32>
    %27 = tpu.matmul %24, %26, %cst_20 {dimension_numbers = #tpu.dot_dimension_numbers<[1], [0], [0], [1], [0, 0, 1, 1], [], []>} : vector<16x128xbf16>, vector<128x128xbf16>, vector<16x128xf32> -> vector<16x128xf32>
    %28 = arith.addf %23, %27 : vector<16x128xf32>
    %29 = vector.extract_strided_slice %12 {offsets = [48, 0], sizes = [16, 128], strides = [1, 1]} : vector<144x128xbf16> to vector<16x128xbf16>
    %c3 = arith.constant 3 : index
    %c0_21 = arith.constant 0 : index
    %c0_22 = arith.constant 0 : index
    %30 = vector.load %arg5[%c3, %c0_21, %c0_22] : memref<9x128x128xbf16, #tpu.memory_space<vmem>>, vector<1x128x128xbf16>
    %31 = vector.shape_cast %30 : vector<1x128x128xbf16> to vector<128x128xbf16>
    %cst_23 = arith.constant dense<0.000000e+00> : vector<16x128xf32>
    %32 = tpu.matmul %29, %31, %cst_23 {dimension_numbers = #tpu.dot_dimension_numbers<[1], [0], [0], [1], [0, 0, 1, 1], [], []>} : vector<16x128xbf16>, vector<128x128xbf16>, vector<16x128xf32> -> vector<16x128xf32>
    %33 = arith.addf %28, %32 : vector<16x128xf32>
    %34 = vector.extract_strided_slice %12 {offsets = [64, 0], sizes = [16, 128], strides = [1, 1]} : vector<144x128xbf16> to vector<16x128xbf16>
    %c4 = arith.constant 4 : index
    %c0_24 = arith.constant 0 : index
    %c0_25 = arith.constant 0 : index
    %35 = vector.load %arg5[%c4, %c0_24, %c0_25] : memref<9x128x128xbf16, #tpu.memory_space<vmem>>, vector<1x128x128xbf16>
    %36 = vector.shape_cast %35 : vector<1x128x128xbf16> to vector<128x128xbf16>
    %cst_26 = arith.constant dense<0.000000e+00> : vector<16x128xf32>
    %37 = tpu.matmul %34, %36, %cst_26 {dimension_numbers = #tpu.dot_dimension_numbers<[1], [0], [0], [1], [0, 0, 1, 1], [], []>} : vector<16x128xbf16>, vector<128x128xbf16>, vector<16x128xf32> -> vector<16x128xf32>
    %38 = arith.addf %33, %37 : vector<16x128xf32>
    %39 = vector.extract_strided_slice %12 {offsets = [80, 0], sizes = [16, 128], strides = [1, 1]} : vector<144x128xbf16> to vector<16x128xbf16>
    %c5 = arith.constant 5 : index
    %c0_27 = arith.constant 0 : index
    %c0_28 = arith.constant 0 : index
    %40 = vector.load %arg5[%c5, %c0_27, %c0_28] : memref<9x128x128xbf16, #tpu.memory_space<vmem>>, vector<1x128x128xbf16>
    %41 = vector.shape_cast %40 : vector<1x128x128xbf16> to vector<128x128xbf16>
    %cst_29 = arith.constant dense<0.000000e+00> : vector<16x128xf32>
    %42 = tpu.matmul %39, %41, %cst_29 {dimension_numbers = #tpu.dot_dimension_numbers<[1], [0], [0], [1], [0, 0, 1, 1], [], []>} : vector<16x128xbf16>, vector<128x128xbf16>, vector<16x128xf32> -> vector<16x128xf32>
    %43 = arith.addf %38, %42 : vector<16x128xf32>
    %44 = vector.extract_strided_slice %12 {offsets = [96, 0], sizes = [16, 128], strides = [1, 1]} : vector<144x128xbf16> to vector<16x128xbf16>
    %c6 = arith.constant 6 : index
    %c0_30 = arith.constant 0 : index
    %c0_31 = arith.constant 0 : index
    %45 = vector.load %arg5[%c6, %c0_30, %c0_31] : memref<9x128x128xbf16, #tpu.memory_space<vmem>>, vector<1x128x128xbf16>
    %46 = vector.shape_cast %45 : vector<1x128x128xbf16> to vector<128x128xbf16>
    %cst_32 = arith.constant dense<0.000000e+00> : vector<16x128xf32>
    %47 = tpu.matmul %44, %46, %cst_32 {dimension_numbers = #tpu.dot_dimension_numbers<[1], [0], [0], [1], [0, 0, 1, 1], [], []>} : vector<16x128xbf16>, vector<128x128xbf16>, vector<16x128xf32> -> vector<16x128xf32>
    %48 = arith.addf %43, %47 : vector<16x128xf32>
    %49 = vector.extract_strided_slice %12 {offsets = [112, 0], sizes = [16, 128], strides = [1, 1]} : vector<144x128xbf16> to vector<16x128xbf16>
    %c7 = arith.constant 7 : index
    %c0_33 = arith.constant 0 : index
    %c0_34 = arith.constant 0 : index
    %50 = vector.load %arg5[%c7, %c0_33, %c0_34] : memref<9x128x128xbf16, #tpu.memory_space<vmem>>, vector<1x128x128xbf16>
    %51 = vector.shape_cast %50 : vector<1x128x128xbf16> to vector<128x128xbf16>
    %cst_35 = arith.constant dense<0.000000e+00> : vector<16x128xf32>
    %52 = tpu.matmul %49, %51, %cst_35 {dimension_numbers = #tpu.dot_dimension_numbers<[1], [0], [0], [1], [0, 0, 1, 1], [], []>} : vector<16x128xbf16>, vector<128x128xbf16>, vector<16x128xf32> -> vector<16x128xf32>
    %53 = arith.addf %48, %52 : vector<16x128xf32>
    %54 = vector.extract_strided_slice %12 {offsets = [128, 0], sizes = [16, 128], strides = [1, 1]} : vector<144x128xbf16> to vector<16x128xbf16>
    %c8 = arith.constant 8 : index
    %c0_36 = arith.constant 0 : index
    %c0_37 = arith.constant 0 : index
    %55 = vector.load %arg5[%c8, %c0_36, %c0_37] : memref<9x128x128xbf16, #tpu.memory_space<vmem>>, vector<1x128x128xbf16>
    %56 = vector.shape_cast %55 : vector<1x128x128xbf16> to vector<128x128xbf16>
    %cst_38 = arith.constant dense<0.000000e+00> : vector<16x128xf32>
    %57 = tpu.matmul %54, %56, %cst_38 {dimension_numbers = #tpu.dot_dimension_numbers<[1], [0], [0], [1], [0, 0, 1, 1], [], []>} : vector<16x128xbf16>, vector<128x128xbf16>, vector<16x128xf32> -> vector<16x128xf32>
    %58 = arith.addf %53, %57 : vector<16x128xf32>
    %c0_39 = arith.constant 0 : index
    %c0_40 = arith.constant 0 : index
    %59 = vector.load %arg6[%c0_39, %c0_40] : memref<1x128xf32, #tpu.memory_space<vmem>>, vector<1x128xf32>
    %60 = vector.broadcast %59 : vector<1x128xf32> to vector<16x128xf32>
    %61 = arith.addf %58, %60 : vector<16x128xf32>
    %c0_41 = arith.constant 0 : index
    %c0_42 = arith.constant 0 : index
    %c0_43 = arith.constant 0 : index
    %62 = vector.load %arg7[%c0_41, %c0_42, %c0_43] : memref<1x16x128xf32, #tpu.memory_space<vmem>>, vector<1x16x128xf32>
    %63 = vector.shape_cast %62 : vector<1x16x128xf32> to vector<16x128xf32>
    %64 = vector.shape_cast %61 : vector<16x128xf32> to vector<1x16x128xf32>
    tpu.vector_store %arg7[%c0_41, %c0_42, %c0_43], %64 {strides = array<i32>} : memref<1x16x128xf32, #tpu.memory_space<vmem>>, vector<1x16x128xf32>,
    return
  }
  func.func @transform_0(%arg0: i32) -> (i32, i32, i32) {
    %c0_i32 = arith.constant 0 : i32
    %c0_i32_0 = arith.constant 0 : i32
    %c0_i32_1 = arith.constant 0 : i32
    return %arg0, %c0_i32, %c0_i32_0 : i32, i32, i32
  }
  func.func @transform_1(%arg0: i32) -> (i32, i32) {
    %c0_i32 = arith.constant 0 : i32
    %c0_i32_0 = arith.constant 0 : i32
    %c0_i32_1 = arith.constant 0 : i32
    return %c0_i32, %c0_i32_0 : i32, i32
  }
  func.func @transform_2(%arg0: i32) -> (i32, i32) {
    %c0_i32 = arith.constant 0 : i32
    %c0_i32_0 = arith.constant 0 : i32
    %c0_i32_1 = arith.constant 0 : i32
    return %c0_i32, %c0_i32_0 : i32, i32
  }
  func.func @transform_3(%arg0: i32) -> (i32, i32) {
    %c0_i32 = arith.constant 0 : i32
    %c0_i32_0 = arith.constant 0 : i32
    %c0_i32_1 = arith.constant 0 : i32
    return %c0_i32, %c0_i32_0 : i32, i32
  }
  func.func @transform_4(%arg0: i32) -> (i32, i32, i32) {
    %c0_i32 = arith.constant 0 : i32
    %c0_i32_0 = arith.constant 0 : i32
    %c0_i32_1 = arith.constant 0 : i32
    %c0_i32_2 = arith.constant 0 : i32
    return %c0_i32, %c0_i32_0, %c0_i32_1 : i32, i32, i32
  }
  func.func @transform_5(%arg0: i32) -> (i32, i32) {
    %c0_i32 = arith.constant 0 : i32
    %c0_i32_0 = arith.constant 0 : i32
    %c0_i32_1 = arith.constant 0 : i32
    return %c0_i32, %c0_i32_0 : i32, i32
  }
  func.func @transform_6(%arg0: i32) -> (i32, i32, i32) {
    %c0_i32 = arith.constant 0 : i32
    %c0_i32_0 = arith.constant 0 : i32
    %c0_i32_1 = arith.constant 0 : i32
    return %arg0, %c0_i32, %c0_i32_0 : i32, i32, i32
  }
}

</mosaic_0001>

<llo_original>
// kernel: encoder_forward.1
$region0: #{encoder_forward.1}
  #allocation0 [shape = 'u32[]', space=smem, size = 0x4, offset = 0x4, fixed_abs, tag = 'smem constant byte address 0x4 - core index']
  #allocation1 [shape = 'u32[144,128]{1,0:T(1,128)}', space=vmem, size = 0x12000, scoped, tag = 'internal scratch']
  %s0 = inlined_call_operand.vmem [shape: bf16[2,64,128], index: 0, kind: input, shape index: {}]
  %s1 = inlined_call_operand.vmem [shape: bf16[128,128], index: 1, kind: input, shape index: {}]
  %s2 = inlined_call_operand.vmem [shape: f32[1,128], index: 2, kind: input, shape index: {}]
  %s3 = inlined_call_operand.vmem [shape: bf16[144,64], index: 3, kind: input, shape index: {}]
  %s4 = inlined_call_operand.vmem [shape: bf16[9,128,128], index: 4, kind: input, shape index: {}]
  %s5 = inlined_call_operand.vmem [shape: f32[1,128], index: 5, kind: input, shape index: {}]
  %s6 = inlined_call_operand.hbm [shape: f32[2,16,128], index: 6, kind: output, shape index: {}]
  %s7 = sld [smem:[#allocation0]]
  $region57: #{encoder_forward.1} parent=0
    _
  %s9 = ssub.s32 1, %s7
  %s10 = scalar_select 0, %s9, %s7
  $region1: #{encoder_forward.1} parent=0
    #allocation2 [shape = 'u8[16384]{0}', space=vmem, size = 0x4000, scoped, tag = 'output window, operand 0']
    #allocation3 [shape = 's32[2]{0}', space=sflag, size = 0x8, scoped, tag = 'scoped memory for encoder_forward.1']
    %11 = vsyncpa [#allocation3], 0
    %s12 = scalar_lea.sflag [#allocation3], 1
    %13 = vsyncpa %s12, 0
    loop: start=0, step=1, limit=4
    $region2: #{encoder_forward.1} parent=1 // loop_pre_header
      _
    $region3: #{encoder_forward.1} parent=1 // loop_header
      %s15 = sphi 0, %s19
      %p16 = scmp.ge.s32.totalorder %s15, 4
      %s25 = sphi 0, %s27
      %s28 = sphi 0, %s25
      %s29 = sphi 0, %s28
      %s45 = sphi 0, %s29
      %s49 = sphi 0, %s49
      %s51 = sphi 0, %s49
      %s52 = sphi 0, %s51
      %s66 = sphi 0, %s52
      %s70 = sphi 0, %s70
      %s72 = sphi 0, %s70
      %s73 = sphi 0, %s72
      %s87 = sphi 0, %s73
      %s91 = sphi 0, %s91
      %s93 = sphi 0, %s91
      %s94 = sphi 0, %s93
      %s108 = sphi 0, %s94
      %s112 = sphi 0, %s112
      %s114 = sphi 0, %s112
      %s115 = sphi 0, %s114
      %s129 = sphi 0, %s115
      %s133 = sphi 0, %s133
      %s135 = sphi 0, %s133
      %s136 = sphi 0, %s135
      %s150 = sphi 0, %s136
      %s156 = sphi 0, %s158
      %s159 = sphi 0, %s156
      %s160 = sphi 0, %s159
      %s176 = sphi 0, %s160
    $region4: #{encoder_forward.1} parent=1 // loop_header_branch
      %18 = sbr.rel (%p16) target = $region8
    $region5: #{encoder_forward.1} parent=1 // loop_body
      %s20 = ssub.s32 %s15, 1
      %s21 = ssub.s32 %s15, 2
      %s22 = sadd.s32 %s15, 1
      %s23 = ssub.s32 %s15, %s22
      %p24 = scmp.eq.s32.totalorder %s23, 0
      %s26 = sadd.s32 %s25, 1
      %s27 = scalar_select %p24, %s25, %s26
      %p30 = pneg %p24
      %p31 = scmp.eq.s32.totalorder %s15, 1
      %p32 = por %p30, %p31
      %p33 = scmp.ne.s32.totalorder %s25, %s28
      %p34 = scmp.eq.s32.totalorder %s15, 0
      %p35 = por %p33, %p34
      %p36 = scmp.ne.s32.totalorder %s25, %s28
      %p37 = scmp.eq.s32.totalorder %s20, 1
      %p38 = por %p36, %p37
      %p39 = scmp.ne.s32.totalorder %s28, %s29
      %p40 = scmp.eq.s32.totalorder %s20, 0
      %p41 = por %p39, %p40
      %p42 = scmp.ne.s32.totalorder %s28, %s29
      %p43 = scmp.eq.s32.totalorder %s21, 1
      %p44 = por %p42, %p43
      %p46 = scmp.ne.s32.totalorder %s29, %s45
      %p47 = scmp.eq.s32.totalorder %s21, 0
      %p48 = por %p46, %p47
      %s50 = sadd.s32 %s49, 1
      %p53 = scmp.eq.s32.totalorder %s15, 1
      %p54 = scmp.ne.s32.totalorder %s49, %s51
      %p55 = scmp.eq.s32.totalorder %s15, 0
      %p56 = por %p54, %p55
      %p57 = scmp.ne.s32.totalorder %s49, %s51
      %p58 = scmp.eq.s32.totalorder %s20, 1
      %p59 = por %p57, %p58
      %p60 = scmp.ne.s32.totalorder %s51, %s52
      %p61 = scmp.eq.s32.totalorder %s20, 0
      %p62 = por %p60, %p61
      %p63 = scmp.ne.s32.totalorder %s51, %s52
      %p64 = scmp.eq.s32.totalorder %s21, 1
      %p65 = por %p63, %p64
      %p67 = scmp.ne.s32.totalorder %s52, %s66
      %p68 = scmp.eq.s32.totalorder %s21, 0
      %p69 = por %p67, %p68
      %s71 = sadd.s32 %s70, 1
      %p74 = scmp.eq.s32.totalorder %s15, 1
      %p75 = scmp.ne.s32.totalorder %s70, %s72
      %p76 = scmp.eq.s32.totalorder %s15, 0
      %p77 = por %p75, %p76
      %p78 = scmp.ne.s32.totalorder %s70, %s72
      %p79 = scmp.eq.s32.totalorder %s20, 1
      %p80 = por %p78, %p79
      %p81 = scmp.ne.s32.totalorder %s72, %s73
      %p82 = scmp.eq.s32.totalorder %s20, 0
      %p83 = por %p81, %p82
      %p84 = scmp.ne.s32.totalorder %s72, %s73
      %p85 = scmp.eq.s32.totalorder %s21, 1
      %p86 = por %p84, %p85
      %p88 = scmp.ne.s32.totalorder %s73, %s87
      %p89 = scmp.eq.s32.totalorder %s21, 0
      %p90 = por %p88, %p89
      %s92 = sadd.s32 %s91, 1
      %p95 = scmp.eq.s32.totalorder %s15, 1
      %p96 = scmp.ne.s32.totalorder %s91, %s93
      %p97 = scmp.eq.s32.totalorder %s15, 0
      %p98 = por %p96, %p97
      %p99 = scmp.ne.s32.totalorder %s91, %s93
      %p100 = scmp.eq.s32.totalorder %s20, 1
      %p101 = por %p99, %p100
      %p102 = scmp.ne.s32.totalorder %s93, %s94
      %p103 = scmp.eq.s32.totalorder %s20, 0
      %p104 = por %p102, %p103
      %p105 = scmp.ne.s32.totalorder %s93, %s94
      %p106 = scmp.eq.s32.totalorder %s21, 1
      %p107 = por %p105, %p106
      %p109 = scmp.ne.s32.totalorder %s94, %s108
      %p110 = scmp.eq.s32.totalorder %s21, 0
      %p111 = por %p109, %p110
      %s113 = sadd.s32 %s112, 1
      %p116 = scmp.eq.s32.totalorder %s15, 1
      %p117 = scmp.ne.s32.totalorder %s112, %s114
      %p118 = scmp.eq.s32.totalorder %s15, 0
      %p119 = por %p117, %p118
      %p120 = scmp.ne.s32.totalorder %s112, %s114
      %p121 = scmp.eq.s32.totalorder %s20, 1
      %p122 = por %p120, %p121
      %p123 = scmp.ne.s32.totalorder %s114, %s115
      %p124 = scmp.eq.s32.totalorder %s20, 0
      %p125 = por %p123, %p124
      %p126 = scmp.ne.s32.totalorder %s114, %s115
      %p127 = scmp.eq.s32.totalorder %s21, 1
      %p128 = por %p126, %p127
      %p130 = scmp.ne.s32.totalorder %s115, %s129
      %p131 = scmp.eq.s32.totalorder %s21, 0
      %p132 = por %p130, %p131
      %s134 = sadd.s32 %s133, 1
      %p137 = scmp.eq.s32.totalorder %s15, 1
      %p138 = scmp.ne.s32.totalorder %s133, %s135
      %p139 = scmp.eq.s32.totalorder %s15, 0
      %p140 = por %p138, %p139
      %p141 = scmp.ne.s32.totalorder %s133, %s135
      %p142 = scmp.eq.s32.totalorder %s20, 1
      %p143 = por %p141, %p142
      %p144 = scmp.ne.s32.totalorder %s135, %s136
      %p145 = scmp.eq.s32.totalorder %s20, 0
      %p146 = por %p144, %p145
      %p147 = scmp.ne.s32.totalorder %s135, %s136
      %p148 = scmp.eq.s32.totalorder %s21, 1
      %p149 = por %p147, %p148
      %p151 = scmp.ne.s32.totalorder %s136, %s150
      %p152 = scmp.eq.s32.totalorder %s21, 0
      %p153 = por %p151, %p152
      %s154 = ssub.s32 %s15, %s22
      %p155 = scmp.eq.s32.totalorder %s154, 0
      %s157 = sadd.s32 %s156, 1
      %s158 = scalar_select %p155, %s156, %s157
      %p161 = pneg %p155
      %p162 = scmp.eq.s32.totalorder %s15, 1
      %p163 = por %p161, %p162
      %p164 = scmp.ne.s32.totalorder %s156, %s159
      %p165 = scmp.eq.s32.totalorder %s15, 0
      %p166 = por %p164, %p165
      %p167 = scmp.ne.s32.totalorder %s156, %s159
      %p168 = scmp.eq.s32.totalorder %s20, 1
      %p169 = por %p167, %p168
      %p170 = scmp.ne.s32.totalorder %s159, %s160
      %p171 = scmp.eq.s32.totalorder %s20, 0
      %p172 = por %p170, %p171
      %p173 = scmp.ne.s32.totalorder %s159, %s160
      %p174 = scmp.eq.s32.totalorder %s21, 1
      %p175 = por %p173, %p174
      %p177 = scmp.ne.s32.totalorder %s160, %s176
      %p178 = scmp.eq.s32.totalorder %s21, 0
      %p179 = por %p177, %p178
      %p180 = scmp.le.s32.totalorder 1, %s15
      %p181 = scmp.lt.s32.totalorder %s15, 3
      %p182 = pnand %p180, %p181
      %p183 = pneg %p182
      // Predicated region
      $region9: #{encoder_forward.1} parent=5 // pred_check
        _
      $region10: #{encoder_forward.1} parent=5 // pred_check_branch
        %185 = sbr.rel (%p182) target = $region12
      $region11: #{encoder_forward.1} parent=5 // pred_region
        %s186 = ssub.s32 %s15, 1
        // Predicated region
        $region13: #{encoder_forward.1} parent=11 // pred_check
          %p187 = pneg %p62
        $region14: #{encoder_forward.1} parent=11 // pred_check_branch
          %189 = sbr.rel (%p187) target = $region16
        $region15: #{encoder_forward.1} parent=11 // pred_region
          _
        $region16: #{encoder_forward.1} parent=11 // pred_fallthru
          _
        // Predicated region
        $region17: #{encoder_forward.1} parent=11 // pred_check
          %p190 = pneg %p83
        $region18: #{encoder_forward.1} parent=11 // pred_check_branch
          %192 = sbr.rel (%p190) target = $region20
        $region19: #{encoder_forward.1} parent=11 // pred_region
          _
        $region20: #{encoder_forward.1} parent=11 // pred_fallthru
          _
        // Predicated region
        $region21: #{encoder_forward.1} parent=11 // pred_check
          %p193 = pneg %p104
        $region22: #{encoder_forward.1} parent=11 // pred_check_branch
          %195 = sbr.rel (%p193) target = $region24
        $region23: #{encoder_forward.1} parent=11 // pred_region
          _
        $region24: #{encoder_forward.1} parent=11 // pred_fallthru
          _
        // Predicated region
        $region25: #{encoder_forward.1} parent=11 // pred_check
          %p196 = pneg %p125
        $region26: #{encoder_forward.1} parent=11 // pred_check_branch
          %198 = sbr.rel (%p196) target = $region28
        $region27: #{encoder_forward.1} parent=11 // pred_region
          _
        $region28: #{encoder_forward.1} parent=11 // pred_fallthru
          _
        // Predicated region
        $region29: #{encoder_forward.1} parent=11 // pred_check
          %p199 = pneg %p146
        $region30: #{encoder_forward.1} parent=11 // pred_check_branch
          %201 = sbr.rel (%p199) target = $region32
        $region31: #{encoder_forward.1} parent=11 // pred_region
          _
        $region32: #{encoder_forward.1} parent=11 // pred_fallthru
          _
      $region12: #{encoder_forward.1} parent=5 // pred_fallthru
        _
      %p202 = scmp.lt.s32.totalorder %s15, 2
      // Predicated region
      $region33: #{encoder_forward.1} parent=5 // pred_check
        %p203 = pneg %p202
      $region34: #{encoder_forward.1} parent=5 // pred_check_branch
        %205 = sbr.rel (%p203) target = $region36
      $region35: #{encoder_forward.1} parent=5 // pred_region
        // Predicated region
        $region37: #{encoder_forward.1} parent=35 // pred_check
          %p206 = pneg %p35
        $region38: #{encoder_forward.1} parent=35 // pred_check_branch
          %208 = sbr.rel (%p206) target = $region40
        $region39: #{encoder_forward.1} parent=35 // pred_region
          %p209 = scmp.lt.s32.totalorder %s15, 1
          %s210 = scalar_select %p209, %s15, 1
          %s211 = smul.addr %s210, 8
          %s212 = smul.addr %s211, 4
          %s213 = scalar_lea.vmem %s0, %s212
        $region40: #{encoder_forward.1} parent=35 // pred_fallthru
          _
      $region36: #{encoder_forward.1} parent=5 // pred_fallthru
        _
      %p214 = scmp.le.s32.totalorder 1, %s15
      %p215 = scmp.lt.s32.totalorder %s15, 3
      %p216 = pnand %p214, %p215
      %p217 = pneg %p216
      // Predicated region
      $region41: #{encoder_forward.1} parent=5 // pred_check
        _
      $region42: #{encoder_forward.1} parent=5 // pred_check_branch
        %219 = sbr.rel (%p216) target = $region44
      $region43: #{encoder_forward.1} parent=5 // pred_region
        %s220 = ssub.s32 %s15, 1
        %p221 = scmp.lt.s32.totalorder %s20, 1
        %s222 = scalar_select %p221, %s20, 1
        %s223 = smul.addr %s222, 8
        %s224 = smul.addr %s223, 4
        %s225 = scalar_lea.vmem %s0, %s224
        %p226 = pneg %p41
        %p227 = pneg %p38
        %p228 = pneg %p62
        %p229 = pneg %p59
        %p230 = pneg %p83
        %p231 = pneg %p80
        %p232 = pneg %p104
        %p233 = pneg %p101
        %p234 = pneg %p125
        %p235 = pneg %p122
        %p236 = pneg %p146
        %p237 = pneg %p143
        %p238 = pneg %p172
        %p239 = pneg %p169
        %s240 = sand.u32 %s159, 1
        %s241 = scalar_lea.sflag [#allocation3], %s240
        %s242 = sand.u32 %s159, 1
        %s243 = smul.addr %s242, 16
        %s244 = scalar_lea.vmem [#allocation2], %s243
        %p245 = scmp.lt.s32.totalorder %s20, 1
        %s246 = scalar_select %p245, %s20, 1
        %s247 = smul.addr %s246, 8
        %s248 = smul.addr %s247, 4
        %s249 = scalar_lea.vmem %s0, %s248
        %v251 = vld [vmem:[%s249] sm:$0xf]
        %v252 = vld [vmem:[%s249 + $0x4] sm:$0xf]
        %v253 = vld [vmem:[%s249 + $0x8] sm:$0xf]
        %v254 = vld [vmem:[%s249 + $0xc] sm:$0xf]
        %v255 = vld [vmem:[%s249 + $0x10] sm:$0xf]
        %v256 = vld [vmem:[%s249 + $0x14] sm:$0xf]
        %v257 = vld [vmem:[%s249 + $0x18] sm:$0xf]
        %v258 = vld [vmem:[%s249 + $0x1c] sm:$0xf]
        %v259 = vld [vmem:[%s1] sm:$0xf]
        %v260 = vld [vmem:[%s1 + $0x4] sm:$0xf]
        %v261 = vld [vmem:[%s1 + $0x8] sm:$0xf]
        %v262 = vld [vmem:[%s1 + $0xc] sm:$0xf]
        %v263 = vld [vmem:[%s1 + $0x10] sm:$0xf]
        %v264 = vld [vmem:[%s1 + $0x14] sm:$0xf]
        %v265 = vld [vmem:[%s1 + $0x18] sm:$0xf]
        %v266 = vld [vmem:[%s1 + $0x1c] sm:$0xf]
        %v267 = vld [vmem:[%s1 + $0x20] sm:$0xf]
        %v268 = vld [vmem:[%s1 + $0x24] sm:$0xf]
        %v269 = vld [vmem:[%s1 + $0x28] sm:$0xf]
        %v270 = vld [vmem:[%s1 + $0x2c] sm:$0xf]
        %v271 = vld [vmem:[%s1 + $0x30] sm:$0xf]
        %v272 = vld [vmem:[%s1 + $0x34] sm:$0xf]
        %v273 = vld [vmem:[%s1 + $0x38] sm:$0xf]
        %v274 = vld [vmem:[%s1 + $0x3c] sm:$0xf]
        %v275 = vld [vmem:[%s2] sm:$0x1]
        %v277 = vlaneseq
        %v278 = vshrl.u32 %v277, 7
        %v279 = vsub.s32 0, %v278
        %v280 = vrot.slane %v275, %v279
        %v290 = vunpack.c.l.b16 %v251
        %v291 = vunpack.c.l.b16 %v252
        %v292 = vunpack.c.l.b16 %v253
        %v293 = vunpack.c.l.b16 %v254
        %v294 = vunpack.c.l.b16 %v255
        %v295 = vunpack.c.l.b16 %v256
        %v296 = vunpack.c.l.b16 %v257
        %v297 = vunpack.c.l.b16 %v258
        %v298 = vpack.c.b16 %v291, %v290
        %v299 = vpack.c.b16 %v293, %v292
        %v300 = vpack.c.b16 %v295, %v294
        %v301 = vpack.c.b16 %v297, %v296
        %v322 = vunpack.c.l.b16 %v259
        %v323 = vunpack.c.l.b16 %v260
        %v324 = vunpack.c.l.b16 %v261
        %v325 = vunpack.c.l.b16 %v262
        %v326 = vunpack.c.l.b16 %v263
        %v327 = vunpack.c.l.b16 %v264
        %v328 = vunpack.c.l.b16 %v265
        %v329 = vunpack.c.l.b16 %v266
        %v330 = vunpack.c.l.b16 %v267
        %v331 = vunpack.c.l.b16 %v268
        %v332 = vunpack.c.l.b16 %v269
        %v333 = vunpack.c.l.b16 %v270
        %v334 = vunpack.c.l.b16 %v271
        %v335 = vunpack.c.l.b16 %v272
        %v336 = vunpack.c.l.b16 %v273
        %v337 = vunpack.c.l.b16 %v274
        %v338 = vpack.c.b16 %v323, %v322
        %v339 = vpack.c.b16 %v325, %v324
        %v340 = vpack.c.b16 %v327, %v326
        %v341 = vpack.c.b16 %v329, %v328
        %v342 = vpack.c.b16 %v331, %v330
        %v343 = vpack.c.b16 %v333, %v332
        %v344 = vpack.c.b16 %v335, %v334
        %v345 = vpack.c.b16 %v337, %v336
        %354 = vmatprep.subr.bf16.mxu0 0
        %355 = vmatpush1.bf16.msra.mxu0 %v345
        %356 = vmatprep.subr.bf16.mxu0 0
        %357 = vmatpush1.bf16.msra.mxu0 %v344
        %358 = vmatprep.subr.bf16.mxu0 0
        %359 = vmatpush1.bf16.msra.mxu0 %v343
        %360 = vmatprep.subr.bf16.mxu0 0
        %361 = vmatpush1.bf16.msra.mxu0 %v342
        %362 = vmatprep.subr.bf16.mxu0 0
        %363 = vmatpush1.bf16.msra.mxu0 %v341
        %364 = vmatprep.subr.bf16.mxu0 0
        %365 = vmatpush1.bf16.msra.mxu0 %v340
        %366 = vmatprep.subr.bf16.mxu0 0
        %367 = vmatpush1.bf16.msra.mxu0 %v339
        %368 = vmatprep.subr.bf16.mxu0 0
        %369 = vmatpush1.bf16.msra.mxu0 %v338
        %370 = vmatprep.subr.bf16.mxu0 0
        %371 = vmatpush2.bf16.msra.mxu0 0
        %372 = vmatprep.subr.bf16.mxu0 0
        %373 = vmatpush2.bf16.msra.mxu0 0
        %374 = vmatprep.subr.bf16.mxu0 0
        %375 = vmatpush2.bf16.msra.mxu0 0
        %376 = vmatprep.subr.bf16.mxu0 0
        %377 = vmatpush2.bf16.msra.mxu0 0
        %378 = vmatprep.subr.bf16.mxu0 0
        %379 = vmatpush2.bf16.msra.mxu0 0
        %380 = vmatprep.subr.bf16.mxu0 0
        %381 = vmatpush2.bf16.msra.mxu0 0
        %382 = vmatprep.subr.bf16.mxu0 0
        %383 = vmatpush2.bf16.msra.mxu0 0
        %384 = vmatprep.subr.bf16.mxu0 0
        %385 = vmatpush2.bf16.msra.mxu0 0
        %386 = vmatprep.mubr.bf16.mxu0 0
        %387 = vmatmul.mubr.bf16.gmra.mxu0 %v298
        %v388 = vpop.f32.mrf.mxu0
        %v389 = vadd.f32 %v280, %v388
        %v390 = vpop.f32.mrf.mxu0
        %v391 = vpop.f32.mrf.mxu0
        %v392 = vadd.f32 %v280, %v391
        %v393 = vpop.f32.mrf.mxu0
        %394 = vmatprep.mubr.bf16.mxu0 0
        %395 = vmatmul.mubr.bf16.gmra.mxu0 %v299
        %v396 = vpop.f32.mrf.mxu0
        %v397 = vadd.f32 %v280, %v396
        %v398 = vpop.f32.mrf.mxu0
        %v399 = vpop.f32.mrf.mxu0
        %v400 = vadd.f32 %v280, %v399
        %v401 = vpop.f32.mrf.mxu0
        %402 = vmatprep.mubr.bf16.mxu0 0
        %403 = vmatmul.mubr.bf16.gmra.mxu0 %v300
        %v404 = vpop.f32.mrf.mxu0
        %v405 = vadd.f32 %v280, %v404
        %v406 = vpop.f32.mrf.mxu0
        %v407 = vpop.f32.mrf.mxu0
        %v408 = vadd.f32 %v280, %v407
        %v409 = vpop.f32.mrf.mxu0
        %410 = vmatprep.mubr.bf16.mxu0 0
        %411 = vmatmul.mubr.bf16.gmra.mxu0 %v301
        %v412 = vpop.f32.mrf.mxu0
        %v413 = vadd.f32 %v280, %v412
        %v414 = vpop.f32.mrf.mxu0
        %v415 = vpop.f32.mrf.mxu0
        %v416 = vadd.f32 %v280, %v415
        %v417 = vpop.f32.mrf.mxu0
        %418 = vdwg.mxu0
        %v419 = vmax.f32 %v389, 0.0
        %v420 = vmax.f32 %v392, 0.0
        %v421 = vmax.f32 %v397, 0.0
        %v422 = vmax.f32 %v400, 0.0
        %v423 = vmax.f32 %v405, 0.0
        %v424 = vmax.f32 %v408, 0.0
        %v425 = vmax.f32 %v413, 0.0
        %v426 = vmax.f32 %v416, 0.0
        %v427 = vpack.c.bf16 %v420, %v419
        %v428 = vpack.c.bf16 %v422, %v421
        %v429 = vpack.c.bf16 %v424, %v423
        %v430 = vpack.c.bf16 %v426, %v425
        %v431 = vld [vmem:[%s3] sm:$0xf]
        %v432 = vld [vmem:[%s3 + $0x4] sm:$0xf]
        %v433 = vld [vmem:[%s3 + $0x8] sm:$0xf]
        %v434 = vld [vmem:[%s3 + $0xc] sm:$0xf]
        %v435 = vld [vmem:[%s3 + $0x10] sm:$0xf]
        %v436 = vld [vmem:[%s3 + $0x14] sm:$0xf]
        %v437 = vld [vmem:[%s3 + $0x18] sm:$0xf]
        %v438 = vld [vmem:[%s3 + $0x1c] sm:$0xf]
        %v439 = vld [vmem:[%s3 + $0x20] sm:$0xf]
        %v440 = vld [vmem:[%s3 + $0x24] sm:$0xf]
        %v441 = vld [vmem:[%s3 + $0x28] sm:$0xf]
        %v442 = vld [vmem:[%s3 + $0x2c] sm:$0xf]
        %v443 = vld [vmem:[%s3 + $0x30] sm:$0xf]
        %v444 = vld [vmem:[%s3 + $0x34] sm:$0xf]
        %v445 = vld [vmem:[%s3 + $0x38] sm:$0xf]
        %v446 = vld [vmem:[%s3 + $0x3c] sm:$0xf]
        %v447 = vld [vmem:[%s3 + $0x40] sm:$0xf]
        %v448 = vld [vmem:[%s3 + $0x44] sm:$0xf]
        %v467 = vunpack.c.l.b16 %v431
        %v468 = vunpack.c.l.b16 %v432
        %v469 = vunpack.c.l.b16 %v433
        %v470 = vunpack.c.l.b16 %v434
        %v471 = vunpack.c.l.b16 %v435
        %v472 = vunpack.c.l.b16 %v436
        %v473 = vunpack.c.l.b16 %v437
        %v474 = vunpack.c.l.b16 %v438
        %v475 = vunpack.c.l.b16 %v439
        %v476 = vunpack.c.l.b16 %v440
        %v477 = vunpack.c.l.b16 %v441
        %v478 = vunpack.c.l.b16 %v442
        %v479 = vunpack.c.l.b16 %v443
        %v480 = vunpack.c.l.b16 %v444
        %v481 = vunpack.c.l.b16 %v445
        %v482 = vunpack.c.l.b16 %v446
        %v483 = vunpack.c.l.b16 %v447
        %v484 = vunpack.c.l.b16 %v448
        %v485 = vpack.c.b16 %v468, %v467
        %v486 = vpack.c.b16 %v470, %v469
        %v487 = vpack.c.b16 %v472, %v471
        %v488 = vpack.c.b16 %v474, %v473
        %v489 = vpack.c.b16 %v476, %v475
        %v490 = vpack.c.b16 %v478, %v477
        %v491 = vpack.c.b16 %v480, %v479
        %v492 = vpack.c.b16 %v482, %v481
        %v493 = vpack.c.b16 %v484, %v483
        %vm494 = vcmask 523264
        %v496 = vsel %vm494, %v485, 0
        %v499 = vsel %vm494, %v486, 0
        %v502 = vsel %vm494, %v487, 0
        %v505 = vsel %vm494, %v488, 0
        %v508 = vsel %vm494, %v489, 0
        %v511 = vsel %vm494, %v490, 0
        %v514 = vsel %vm494, %v491, 0
        %v517 = vsel %vm494, %v492, 0
        %v520 = vsel %vm494, %v493, 0
        %522 = vmatprep.subr.bf16.mxu0 0
        %523 = vmatpush1.bf16.msra.mxu0 0
        %524 = vmatprep.subr.bf16.mxu0 0
        %525 = vmatpush1.bf16.msra.mxu0 0
        %526 = vmatprep.subr.bf16.mxu0 0
        %527 = vmatpush1.bf16.msra.mxu0 0
        %528 = vmatprep.subr.bf16.mxu0 0
        %529 = vmatpush1.bf16.msra.mxu0 0
        %530 = vmatprep.subr.bf16.mxu0 0
        %531 = vmatpush1.bf16.msra.mxu0 %v430
        %532 = vmatprep.subr.bf16.mxu0 0
        %533 = vmatpush1.bf16.msra.mxu0 %v429
        %534 = vmatprep.subr.bf16.mxu0 0
        %535 = vmatpush1.bf16.msra.mxu0 %v428
        %536 = vmatprep.subr.bf16.mxu0 0
        %537 = vmatpush1.bf16.msra.mxu0 %v427
        %538 = vmatprep.subr.bf16.mxu0 0
        %539 = vmatpush2.bf16.msra.mxu0 0
        %540 = vmatprep.subr.bf16.mxu0 0
        %541 = vmatpush2.bf16.msra.mxu0 0
        %542 = vmatprep.subr.bf16.mxu0 0
        %543 = vmatpush2.bf16.msra.mxu0 0
        %544 = vmatprep.subr.bf16.mxu0 0
        %545 = vmatpush2.bf16.msra.mxu0 0
        %546 = vmatprep.subr.bf16.mxu0 0
        %547 = vmatpush2.bf16.msra.mxu0 0
        %548 = vmatprep.subr.bf16.mxu0 0
        %549 = vmatpush2.bf16.msra.mxu0 0
        %550 = vmatprep.subr.bf16.mxu0 0
        %551 = vmatpush2.bf16.msra.mxu0 0
        %552 = vmatprep.subr.bf16.mxu0 0
        %553 = vmatpush2.bf16.msra.mxu0 0
        %554 = vmatprep.mubr.bf16.mxu0 0
        %555 = vmatmul.mubr.bf16.gmra.mxu0 %v496
        %v556 = vpop.f32.mrf.mxu0
        %v557 = vadd.f32 0.0, %v556
        %v558 = vpop.f32.mrf.mxu0
        %v559 = vpop.f32.mrf.mxu0
        %v560 = vadd.f32 0.0, %v559
        %v561 = vpop.f32.mrf.mxu0
        %562 = vmatprep.mubr.bf16.mxu0 0
        %563 = vmatmul.mubr.bf16.gmra.mxu0 %v499
        %v564 = vpop.f32.mrf.mxu0
        %v565 = vadd.f32 0.0, %v564
        %v566 = vpop.f32.mrf.mxu0
        %v567 = vpop.f32.mrf.mxu0
        %v568 = vadd.f32 0.0, %v567
        %v569 = vpop.f32.mrf.mxu0
        %570 = vmatprep.mubr.bf16.mxu0 0
        %571 = vmatmul.mubr.bf16.gmra.mxu0 %v502
        %v572 = vpop.f32.mrf.mxu0
        %v573 = vadd.f32 0.0, %v572
        %v574 = vpop.f32.mrf.mxu0
        %v575 = vpop.f32.mrf.mxu0
        %v576 = vadd.f32 0.0, %v575
        %v577 = vpop.f32.mrf.mxu0
        %578 = vmatprep.mubr.bf16.mxu0 0
        %579 = vmatmul.mubr.bf16.gmra.mxu0 %v505
        %v580 = vpop.f32.mrf.mxu0
        %v581 = vadd.f32 0.0, %v580
        %v582 = vpop.f32.mrf.mxu0
        %v583 = vpop.f32.mrf.mxu0
        %v584 = vadd.f32 0.0, %v583
        %v585 = vpop.f32.mrf.mxu0
        %586 = vmatprep.mubr.bf16.mxu0 0
        %587 = vmatmul.mubr.bf16.gmra.mxu0 %v508
        %v588 = vpop.f32.mrf.mxu0
        %v589 = vadd.f32 0.0, %v588
        %v590 = vpop.f32.mrf.mxu0
        %v591 = vpop.f32.mrf.mxu0
        %v592 = vadd.f32 0.0, %v591
        %v593 = vpop.f32.mrf.mxu0
        %594 = vmatprep.mubr.bf16.mxu0 0
        %595 = vmatmul.mubr.bf16.gmra.mxu0 %v511
        %v596 = vpop.f32.mrf.mxu0
        %v597 = vadd.f32 0.0, %v596
        %v598 = vpop.f32.mrf.mxu0
        %v599 = vpop.f32.mrf.mxu0
        %v600 = vadd.f32 0.0, %v599
        %v601 = vpop.f32.mrf.mxu0
        %602 = vmatprep.mubr.bf16.mxu0 0
        %603 = vmatmul.mubr.bf16.gmra.mxu0 %v514
        %v604 = vpop.f32.mrf.mxu0
        %v605 = vadd.f32 0.0, %v604
        %v606 = vpop.f32.mrf.mxu0
        %v607 = vpop.f32.mrf.mxu0
        %v608 = vadd.f32 0.0, %v607
        %v609 = vpop.f32.mrf.mxu0
        %610 = vmatprep.mubr.bf16.mxu0 0
        %611 = vmatmul.mubr.bf16.gmra.mxu0 %v517
        %v612 = vpop.f32.mrf.mxu0
        %v613 = vadd.f32 0.0, %v612
        %v614 = vpop.f32.mrf.mxu0
        %v615 = vpop.f32.mrf.mxu0
        %v616 = vadd.f32 0.0, %v615
        %v617 = vpop.f32.mrf.mxu0
        %618 = vmatprep.mubr.bf16.mxu0 0
        %619 = vmatmul.mubr.bf16.gmra.mxu0 %v520
        %v620 = vpop.f32.mrf.mxu0
        %v621 = vadd.f32 0.0, %v620
        %v622 = vpop.f32.mrf.mxu0
        %v623 = vpop.f32.mrf.mxu0
        %v624 = vadd.f32 0.0, %v623
        %v625 = vpop.f32.mrf.mxu0
        %626 = vdwg.mxu0
        %v627 = vpack.c.bf16 %v560, %v557
        %v628 = vpack.c.bf16 %v568, %v565
        %v629 = vpack.c.bf16 %v576, %v573
        %v630 = vpack.c.bf16 %v584, %v581
        %v631 = vpack.c.bf16 %v592, %v589
        %v632 = vpack.c.bf16 %v600, %v597
        %v633 = vpack.c.bf16 %v608, %v605
        %v634 = vpack.c.bf16 %v616, %v613
        %v635 = vpack.c.bf16 %v624, %v621
        %v636 = vld [vmem:[%s4] sm:$0xf]
        %v637 = vld [vmem:[%s4 + $0x4] sm:$0xf]
        %v638 = vld [vmem:[%s4 + $0x8] sm:$0xf]
        %v639 = vld [vmem:[%s4 + $0xc] sm:$0xf]
        %v640 = vld [vmem:[%s4 + $0x10] sm:$0xf]
        %v641 = vld [vmem:[%s4 + $0x14] sm:$0xf]
        %v642 = vld [vmem:[%s4 + $0x18] sm:$0xf]
        %v643 = vld [vmem:[%s4 + $0x1c] sm:$0xf]
        %v644 = vld [vmem:[%s4 + $0x20] sm:$0xf]
        %v645 = vld [vmem:[%s4 + $0x24] sm:$0xf]
        %v646 = vld [vmem:[%s4 + $0x28] sm:$0xf]
        %v647 = vld [vmem:[%s4 + $0x2c] sm:$0xf]
        %v648 = vld [vmem:[%s4 + $0x30] sm:$0xf]
        %v649 = vld [vmem:[%s4 + $0x34] sm:$0xf]
        %v650 = vld [vmem:[%s4 + $0x38] sm:$0xf]
        %v651 = vld [vmem:[%s4 + $0x3c] sm:$0xf]
        %s652 = scalar_lea.vmem %s4, 64
        %v653 = vld [vmem:[%s652] sm:$0xf]
        %v654 = vld [vmem:[%s652 + $0x4] sm:$0xf]
        %v655 = vld [vmem:[%s652 + $0x8] sm:$0xf]
        %v656 = vld [vmem:[%s652 + $0xc] sm:$0xf]
        %v657 = vld [vmem:[%s652 + $0x10] sm:$0xf]
        %v658 = vld [vmem:[%s652 + $0x14] sm:$0xf]
        %v659 = vld [vmem:[%s652 + $0x18] sm:$0xf]
        %v660 = vld [vmem:[%s652 + $0x1c] sm:$0xf]
        %v661 = vld [vmem:[%s652 + $0x20] sm:$0xf]
        %v662 = vld [vmem:[%s652 + $0x24] sm:$0xf]
        %v663 = vld [vmem:[%s652 + $0x28] sm:$0xf]
        %v664 = vld [vmem:[%s652 + $0x2c] sm:$0xf]
        %v665 = vld [vmem:[%s652 + $0x30] sm:$0xf]
        %v666 = vld [vmem:[%s652 + $0x34] sm:$0xf]
        %v667 = vld [vmem:[%s652 + $0x38] sm:$0xf]
        %v668 = vld [vmem:[%s652 + $0x3c] sm:$0xf]
        %v685 = vunpack.c.l.b16 %v653
        %v686 = vunpack.c.l.b16 %v654
        %v687 = vunpack.c.l.b16 %v655
        %v688 = vunpack.c.l.b16 %v656
        %v689 = vunpack.c.l.b16 %v657
        %v690 = vunpack.c.l.b16 %v658
        %v691 = vunpack.c.l.b16 %v659
        %v692 = vunpack.c.l.b16 %v660
        %v693 = vunpack.c.l.b16 %v661
        %v694 = vunpack.c.l.b16 %v662
        %v695 = vunpack.c.l.b16 %v663
        %v696 = vunpack.c.l.b16 %v664
        %v697 = vunpack.c.l.b16 %v665
        %v698 = vunpack.c.l.b16 %v666
        %v699 = vunpack.c.l.b16 %v667
        %v700 = vunpack.c.l.b16 %v668
        %v701 = vpack.c.b16 %v686, %v685
        %v702 = vpack.c.b16 %v688, %v687
        %v703 = vpack.c.b16 %v690, %v689
        %v704 = vpack.c.b16 %v692, %v691
        %v705 = vpack.c.b16 %v694, %v693
        %v706 = vpack.c.b16 %v696, %v695
        %v707 = vpack.c.b16 %v698, %v697
        %v708 = vpack.c.b16 %v700, %v699
        %717 = vmatprep.subr.bf16.mxu0 0
        %718 = vmatpush1.bf16.msra.mxu0 %v708
        %719 = vmatprep.subr.bf16.mxu0 0
        %720 = vmatpush1.bf16.msra.mxu0 %v707
        %721 = vmatprep.subr.bf16.mxu0 0
        %722 = vmatpush1.bf16.msra.mxu0 %v706
        %723 = vmatprep.subr.bf16.mxu0 0
        %724 = vmatpush1.bf16.msra.mxu0 %v705
        %725 = vmatprep.subr.bf16.mxu0 0
        %726 = vmatpush1.bf16.msra.mxu0 %v704
        %727 = vmatprep.subr.bf16.mxu0 0
        %728 = vmatpush1.bf16.msra.mxu0 %v703
        %729 = vmatprep.subr.bf16.mxu0 0
        %730 = vmatpush1.bf16.msra.mxu0 %v702
        %731 = vmatprep.subr.bf16.mxu0 0
        %732 = vmatpush1.bf16.msra.mxu0 %v701
        %733 = vmatprep.subr.bf16.mxu0 0
        %734 = vmatpush2.bf16.msra.mxu0 0
        %735 = vmatprep.subr.bf16.mxu0 0
        %736 = vmatpush2.bf16.msra.mxu0 0
        %737 = vmatprep.subr.bf16.mxu0 0
        %738 = vmatpush2.bf16.msra.mxu0 0
        %739 = vmatprep.subr.bf16.mxu0 0
        %740 = vmatpush2.bf16.msra.mxu0 0
        %741 = vmatprep.subr.bf16.mxu0 0
        %742 = vmatpush2.bf16.msra.mxu0 0
        %743 = vmatprep.subr.bf16.mxu0 0
        %744 = vmatpush2.bf16.msra.mxu0 0
        %745 = vmatprep.subr.bf16.mxu0 0
        %746 = vmatpush2.bf16.msra.mxu0 0
        %747 = vmatprep.subr.bf16.mxu0 0
        %748 = vmatpush2.bf16.msra.mxu0 0
        %749 = vmatprep.mubr.bf16.mxu0 0
        %750 = vmatmul.mubr.bf16.gmra.mxu0 %v628
        %v751 = vpop.f32.mrf.mxu0
        %v752 = vadd.f32 0.0, %v751
        %v753 = vpop.f32.mrf.mxu0
        %v754 = vpop.f32.mrf.mxu0
        %v755 = vadd.f32 0.0, %v754
        %v756 = vpop.f32.mrf.mxu0
        %757 = vdwg.mxu0
        %v774 = vunpack.c.l.b16 %v636
        %v775 = vunpack.c.l.b16 %v637
        %v776 = vunpack.c.l.b16 %v638
        %v777 = vunpack.c.l.b16 %v639
        %v778 = vunpack.c.l.b16 %v640
        %v779 = vunpack.c.l.b16 %v641
        %v780 = vunpack.c.l.b16 %v642
        %v781 = vunpack.c.l.b16 %v643
        %v782 = vunpack.c.l.b16 %v644
        %v783 = vunpack.c.l.b16 %v645
        %v784 = vunpack.c.l.b16 %v646
        %v785 = vunpack.c.l.b16 %v647
        %v786 = vunpack.c.l.b16 %v648
        %v787 = vunpack.c.l.b16 %v649
        %v788 = vunpack.c.l.b16 %v650
        %v789 = vunpack.c.l.b16 %v651
        %v790 = vpack.c.b16 %v775, %v774
        %v791 = vpack.c.b16 %v777, %v776
        %v792 = vpack.c.b16 %v779, %v778
        %v793 = vpack.c.b16 %v781, %v780
        %v794 = vpack.c.b16 %v783, %v782
        %v795 = vpack.c.b16 %v785, %v784
        %v796 = vpack.c.b16 %v787, %v786
        %v797 = vpack.c.b16 %v789, %v788
        %806 = vmatprep.subr.bf16.mxu0 0
        %807 = vmatpush1.bf16.msra.mxu0 %v797
        %808 = vmatprep.subr.bf16.mxu0 0
        %809 = vmatpush1.bf16.msra.mxu0 %v796
        %810 = vmatprep.subr.bf16.mxu0 0
        %811 = vmatpush1.bf16.msra.mxu0 %v795
        %812 = vmatprep.subr.bf16.mxu0 0
        %813 = vmatpush1.bf16.msra.mxu0 %v794
        %814 = vmatprep.subr.bf16.mxu0 0
        %815 = vmatpush1.bf16.msra.mxu0 %v793
        %816 = vmatprep.subr.bf16.mxu0 0
        %817 = vmatpush1.bf16.msra.mxu0 %v792
        %818 = vmatprep.subr.bf16.mxu0 0
        %819 = vmatpush1.bf16.msra.mxu0 %v791
        %820 = vmatprep.subr.bf16.mxu0 0
        %821 = vmatpush1.bf16.msra.mxu0 %v790
        %822 = vmatprep.subr.bf16.mxu0 0
        %823 = vmatpush2.bf16.msra.mxu0 0
        %824 = vmatprep.subr.bf16.mxu0 0
        %825 = vmatpush2.bf16.msra.mxu0 0
        %826 = vmatprep.subr.bf16.mxu0 0
        %827 = vmatpush2.bf16.msra.mxu0 0
        %828 = vmatprep.subr.bf16.mxu0 0
        %829 = vmatpush2.bf16.msra.mxu0 0
        %830 = vmatprep.subr.bf16.mxu0 0
        %831 = vmatpush2.bf16.msra.mxu0 0
        %832 = vmatprep.subr.bf16.mxu0 0
        %833 = vmatpush2.bf16.msra.mxu0 0
        %834 = vmatprep.subr.bf16.mxu0 0
        %835 = vmatpush2.bf16.msra.mxu0 0
        %836 = vmatprep.subr.bf16.mxu0 0
        %837 = vmatpush2.bf16.msra.mxu0 0
        %838 = vmatprep.mubr.bf16.mxu0 0
        %839 = vmatmul.mubr.bf16.gmra.mxu0 %v627
        %v840 = vpop.f32.mrf.mxu0
        %v841 = vadd.f32 %v752, %v840
        %v842 = vpop.f32.mrf.mxu0
        %v843 = vpop.f32.mrf.mxu0
        %v844 = vadd.f32 %v755, %v843
        %v845 = vpop.f32.mrf.mxu0
        %846 = vdwg.mxu0
        %s847 = scalar_lea.vmem %s4, 128
        %v848 = vld [vmem:[%s847] sm:$0xf]
        %v849 = vld [vmem:[%s847 + $0x4] sm:$0xf]
        %v850 = vld [vmem:[%s847 + $0x8] sm:$0xf]
        %v851 = vld [vmem:[%s847 + $0xc] sm:$0xf]
        %v852 = vld [vmem:[%s847 + $0x10] sm:$0xf]
        %v853 = vld [vmem:[%s847 + $0x14] sm:$0xf]
        %v854 = vld [vmem:[%s847 + $0x18] sm:$0xf]
        %v855 = vld [vmem:[%s847 + $0x1c] sm:$0xf]
        %v856 = vld [vmem:[%s847 + $0x20] sm:$0xf]
        %v857 = vld [vmem:[%s847 + $0x24] sm:$0xf]
        %v858 = vld [vmem:[%s847 + $0x28] sm:$0xf]
        %v859 = vld [vmem:[%s847 + $0x2c] sm:$0xf]
        %v860 = vld [vmem:[%s847 + $0x30] sm:$0xf]
        %v861 = vld [vmem:[%s847 + $0x34] sm:$0xf]
        %v862 = vld [vmem:[%s847 + $0x38] sm:$0xf]
        %v863 = vld [vmem:[%s847 + $0x3c] sm:$0xf]
        %v880 = vunpack.c.l.b16 %v848
        %v881 = vunpack.c.l.b16 %v849
        %v882 = vunpack.c.l.b16 %v850
        %v883 = vunpack.c.l.b16 %v851
        %v884 = vunpack.c.l.b16 %v852
        %v885 = vunpack.c.l.b16 %v853
        %v886 = vunpack.c.l.b16 %v854
        %v887 = vunpack.c.l.b16 %v855
        %v888 = vunpack.c.l.b16 %v856
        %v889 = vunpack.c.l.b16 %v857
        %v890 = vunpack.c.l.b16 %v858
        %v891 = vunpack.c.l.b16 %v859
        %v892 = vunpack.c.l.b16 %v860
        %v893 = vunpack.c.l.b16 %v861
        %v894 = vunpack.c.l.b16 %v862
        %v895 = vunpack.c.l.b16 %v863
        %v896 = vpack.c.b16 %v881, %v880
        %v897 = vpack.c.b16 %v883, %v882
        %v898 = vpack.c.b16 %v885, %v884
        %v899 = vpack.c.b16 %v887, %v886
        %v900 = vpack.c.b16 %v889, %v888
        %v901 = vpack.c.b16 %v891, %v890
        %v902 = vpack.c.b16 %v893, %v892
        %v903 = vpack.c.b16 %v895, %v894
        %912 = vmatprep.subr.bf16.mxu0 0
        %913 = vmatpush1.bf16.msra.mxu0 %v903
        %914 = vmatprep.subr.bf16.mxu0 0
        %915 = vmatpush1.bf16.msra.mxu0 %v902
        %916 = vmatprep.subr.bf16.mxu0 0
        %917 = vmatpush1.bf16.msra.mxu0 %v901
        %918 = vmatprep.subr.bf16.mxu0 0
        %919 = vmatpush1.bf16.msra.mxu0 %v900
        %920 = vmatprep.subr.bf16.mxu0 0
        %921 = vmatpush1.bf16.msra.mxu0 %v899
        %922 = vmatprep.subr.bf16.mxu0 0
        %923 = vmatpush1.bf16.msra.mxu0 %v898
        %924 = vmatprep.subr.bf16.mxu0 0
        %925 = vmatpush1.bf16.msra.mxu0 %v897
        %926 = vmatprep.subr.bf16.mxu0 0
        %927 = vmatpush1.bf16.msra.mxu0 %v896
        %928 = vmatprep.subr.bf16.mxu0 0
        %929 = vmatpush2.bf16.msra.mxu0 0
        %930 = vmatprep.subr.bf16.mxu0 0
        %931 = vmatpush2.bf16.msra.mxu0 0
        %932 = vmatprep.subr.bf16.mxu0 0
        %933 = vmatpush2.bf16.msra.mxu0 0
        %934 = vmatprep.subr.bf16.mxu0 0
        %935 = vmatpush2.bf16.msra.mxu0 0
        %936 = vmatprep.subr.bf16.mxu0 0
        %937 = vmatpush2.bf16.msra.mxu0 0
        %938 = vmatprep.subr.bf16.mxu0 0
        %939 = vmatpush2.bf16.msra.mxu0 0
        %940 = vmatprep.subr.bf16.mxu0 0
        %941 = vmatpush2.bf16.msra.mxu0 0
        %942 = vmatprep.subr.bf16.mxu0 0
        %943 = vmatpush2.bf16.msra.mxu0 0
        %944 = vmatprep.mubr.bf16.mxu0 0
        %945 = vmatmul.mubr.bf16.gmra.mxu0 %v629
        %v946 = vpop.f32.mrf.mxu0
        %v947 = vadd.f32 0.0, %v946
        %v948 = vpop.f32.mrf.mxu0
        %v949 = vpop.f32.mrf.mxu0
        %v950 = vadd.f32 0.0, %v949
        %v951 = vpop.f32.mrf.mxu0
        %952 = vdwg.mxu0
        %v953 = vadd.f32 %v841, %v947
        %v954 = vadd.f32 %v844, %v950
        %s955 = scalar_lea.vmem %s4, 192
        %v956 = vld [vmem:[%s955] sm:$0xf]
        %v957 = vld [vmem:[%s955 + $0x4] sm:$0xf]
        %v958 = vld [vmem:[%s955 + $0x8] sm:$0xf]
        %v959 = vld [vmem:[%s955 + $0xc] sm:$0xf]
        %v960 = vld [vmem:[%s955 + $0x10] sm:$0xf]
        %v961 = vld [vmem:[%s955 + $0x14] sm:$0xf]
        %v962 = vld [vmem:[%s955 + $0x18] sm:$0xf]
        %v963 = vld [vmem:[%s955 + $0x1c] sm:$0xf]
        %v964 = vld [vmem:[%s955 + $0x20] sm:$0xf]
        %v965 = vld [vmem:[%s955 + $0x24] sm:$0xf]
        %v966 = vld [vmem:[%s955 + $0x28] sm:$0xf]
        %v967 = vld [vmem:[%s955 + $0x2c] sm:$0xf]
        %v968 = vld [vmem:[%s955 + $0x30] sm:$0xf]
        %v969 = vld [vmem:[%s955 + $0x34] sm:$0xf]
        %v970 = vld [vmem:[%s955 + $0x38] sm:$0xf]
        %v971 = vld [vmem:[%s955 + $0x3c] sm:$0xf]
        %v988 = vunpack.c.l.b16 %v956
        %v989 = vunpack.c.l.b16 %v957
        %v990 = vunpack.c.l.b16 %v958
        %v991 = vunpack.c.l.b16 %v959
        %v992 = vunpack.c.l.b16 %v960
        %v993 = vunpack.c.l.b16 %v961
        %v994 = vunpack.c.l.b16 %v962
        %v995 = vunpack.c.l.b16 %v963
        %v996 = vunpack.c.l.b16 %v964
        %v997 = vunpack.c.l.b16 %v965
        %v998 = vunpack.c.l.b16 %v966
        %v999 = vunpack.c.l.b16 %v967
        %v1000 = vunpack.c.l.b16 %v968
        %v1001 = vunpack.c.l.b16 %v969
        %v1002 = vunpack.c.l.b16 %v970
        %v1003 = vunpack.c.l.b16 %v971
        %v1004 = vpack.c.b16 %v989, %v988
        %v1005 = vpack.c.b16 %v991, %v990
        %v1006 = vpack.c.b16 %v993, %v992
        %v1007 = vpack.c.b16 %v995, %v994
        %v1008 = vpack.c.b16 %v997, %v996
        %v1009 = vpack.c.b16 %v999, %v998
        %v1010 = vpack.c.b16 %v1001, %v1000
        %v1011 = vpack.c.b16 %v1003, %v1002
        %1020 = vmatprep.subr.bf16.mxu0 0
        %1021 = vmatpush1.bf16.msra.mxu0 %v1011
        %1022 = vmatprep.subr.bf16.mxu0 0
        %1023 = vmatpush1.bf16.msra.mxu0 %v1010
        %1024 = vmatprep.subr.bf16.mxu0 0
        %1025 = vmatpush1.bf16.msra.mxu0 %v1009
        %1026 = vmatprep.subr.bf16.mxu0 0
        %1027 = vmatpush1.bf16.msra.mxu0 %v1008
        %1028 = vmatprep.subr.bf16.mxu0 0
        %1029 = vmatpush1.bf16.msra.mxu0 %v1007
        %1030 = vmatprep.subr.bf16.mxu0 0
        %1031 = vmatpush1.bf16.msra.mxu0 %v1006
        %1032 = vmatprep.subr.bf16.mxu0 0
        %1033 = vmatpush1.bf16.msra.mxu0 %v1005
        %1034 = vmatprep.subr.bf16.mxu0 0
        %1035 = vmatpush1.bf16.msra.mxu0 %v1004
        %1036 = vmatprep.subr.bf16.mxu0 0
        %1037 = vmatpush2.bf16.msra.mxu0 0
        %1038 = vmatprep.subr.bf16.mxu0 0
        %1039 = vmatpush2.bf16.msra.mxu0 0
        %1040 = vmatprep.subr.bf16.mxu0 0
        %1041 = vmatpush2.bf16.msra.mxu0 0
        %1042 = vmatprep.subr.bf16.mxu0 0
        %1043 = vmatpush2.bf16.msra.mxu0 0
        %1044 = vmatprep.subr.bf16.mxu0 0
        %1045 = vmatpush2.bf16.msra.mxu0 0
        %1046 = vmatprep.subr.bf16.mxu0 0
        %1047 = vmatpush2.bf16.msra.mxu0 0
        %1048 = vmatprep.subr.bf16.mxu0 0
        %1049 = vmatpush2.bf16.msra.mxu0 0
        %1050 = vmatprep.subr.bf16.mxu0 0
        %1051 = vmatpush2.bf16.msra.mxu0 0
        %1052 = vmatprep.mubr.bf16.mxu0 0
        %1053 = vmatmul.mubr.bf16.gmra.mxu0 %v630
        %v1054 = vpop.f32.mrf.mxu0
        %v1055 = vadd.f32 0.0, %v1054
        %v1056 = vpop.f32.mrf.mxu0
        %v1057 = vpop.f32.mrf.mxu0
        %v1058 = vadd.f32 0.0, %v1057
        %v1059 = vpop.f32.mrf.mxu0
        %1060 = vdwg.mxu0
        %v1061 = vadd.f32 %v953, %v1055
        %v1062 = vadd.f32 %v954, %v1058
        %s1063 = scalar_lea.vmem %s4, 256
        %v1064 = vld [vmem:[%s1063] sm:$0xf]
        %v1065 = vld [vmem:[%s1063 + $0x4] sm:$0xf]
        %v1066 = vld [vmem:[%s1063 + $0x8] sm:$0xf]
        %v1067 = vld [vmem:[%s1063 + $0xc] sm:$0xf]
        %v1068 = vld [vmem:[%s1063 + $0x10] sm:$0xf]
        %v1069 = vld [vmem:[%s1063 + $0x14] sm:$0xf]
        %v1070 = vld [vmem:[%s1063 + $0x18] sm:$0xf]
        %v1071 = vld [vmem:[%s1063 + $0x1c] sm:$0xf]
        %v1072 = vld [vmem:[%s1063 + $0x20] sm:$0xf]
        %v1073 = vld [vmem:[%s1063 + $0x24] sm:$0xf]
        %v1074 = vld [vmem:[%s1063 + $0x28] sm:$0xf]
        %v1075 = vld [vmem:[%s1063 + $0x2c] sm:$0xf]
        %v1076 = vld [vmem:[%s1063 + $0x30] sm:$0xf]
        %v1077 = vld [vmem:[%s1063 + $0x34] sm:$0xf]
        %v1078 = vld [vmem:[%s1063 + $0x38] sm:$0xf]
        %v1079 = vld [vmem:[%s1063 + $0x3c] sm:$0xf]
        %v1096 = vunpack.c.l.b16 %v1064
        %v1097 = vunpack.c.l.b16 %v1065
        %v1098 = vunpack.c.l.b16 %v1066
        %v1099 = vunpack.c.l.b16 %v1067
        %v1100 = vunpack.c.l.b16 %v1068
        %v1101 = vunpack.c.l.b16 %v1069
        %v1102 = vunpack.c.l.b16 %v1070
        %v1103 = vunpack.c.l.b16 %v1071
        %v1104 = vunpack.c.l.b16 %v1072
        %v1105 = vunpack.c.l.b16 %v1073
        %v1106 = vunpack.c.l.b16 %v1074
        %v1107 = vunpack.c.l.b16 %v1075
        %v1108 = vunpack.c.l.b16 %v1076
        %v1109 = vunpack.c.l.b16 %v1077
        %v1110 = vunpack.c.l.b16 %v1078
        %v1111 = vunpack.c.l.b16 %v1079
        %v1112 = vpack.c.b16 %v1097, %v1096
        %v1113 = vpack.c.b16 %v1099, %v1098
        %v1114 = vpack.c.b16 %v1101, %v1100
        %v1115 = vpack.c.b16 %v1103, %v1102
        %v1116 = vpack.c.b16 %v1105, %v1104
        %v1117 = vpack.c.b16 %v1107, %v1106
        %v1118 = vpack.c.b16 %v1109, %v1108
        %v1119 = vpack.c.b16 %v1111, %v1110
        %1128 = vmatprep.subr.bf16.mxu0 0
        %1129 = vmatpush1.bf16.msra.mxu0 %v1119
        %1130 = vmatprep.subr.bf16.mxu0 0
        %1131 = vmatpush1.bf16.msra.mxu0 %v1118
        %1132 = vmatprep.subr.bf16.mxu0 0
        %1133 = vmatpush1.bf16.msra.mxu0 %v1117
        %1134 = vmatprep.subr.bf16.mxu0 0
        %1135 = vmatpush1.bf16.msra.mxu0 %v1116
        %1136 = vmatprep.subr.bf16.mxu0 0
        %1137 = vmatpush1.bf16.msra.mxu0 %v1115
        %1138 = vmatprep.subr.bf16.mxu0 0
        %1139 = vmatpush1.bf16.msra.mxu0 %v1114
        %1140 = vmatprep.subr.bf16.mxu0 0
        %1141 = vmatpush1.bf16.msra.mxu0 %v1113
        %1142 = vmatprep.subr.bf16.mxu0 0
        %1143 = vmatpush1.bf16.msra.mxu0 %v1112
        %1144 = vmatprep.subr.bf16.mxu0 0
        %1145 = vmatpush2.bf16.msra.mxu0 0
        %1146 = vmatprep.subr.bf16.mxu0 0
        %1147 = vmatpush2.bf16.msra.mxu0 0
        %1148 = vmatprep.subr.bf16.mxu0 0
        %1149 = vmatpush2.bf16.msra.mxu0 0
        %1150 = vmatprep.subr.bf16.mxu0 0
        %1151 = vmatpush2.bf16.msra.mxu0 0
        %1152 = vmatprep.subr.bf16.mxu0 0
        %1153 = vmatpush2.bf16.msra.mxu0 0
        %1154 = vmatprep.subr.bf16.mxu0 0
        %1155 = vmatpush2.bf16.msra.mxu0 0
        %1156 = vmatprep.subr.bf16.mxu0 0
        %1157 = vmatpush2.bf16.msra.mxu0 0
        %1158 = vmatprep.subr.bf16.mxu0 0
        %1159 = vmatpush2.bf16.msra.mxu0 0
        %1160 = vmatprep.mubr.bf16.mxu0 0
        %1161 = vmatmul.mubr.bf16.gmra.mxu0 %v631
        %v1162 = vpop.f32.mrf.mxu0
        %v1163 = vadd.f32 0.0, %v1162
        %v1164 = vpop.f32.mrf.mxu0
        %v1165 = vpop.f32.mrf.mxu0
        %v1166 = vadd.f32 0.0, %v1165
        %v1167 = vpop.f32.mrf.mxu0
        %1168 = vdwg.mxu0
        %v1169 = vadd.f32 %v1061, %v1163
        %v1170 = vadd.f32 %v1062, %v1166
        %s1171 = scalar_lea.vmem %s4, 320
        %v1172 = vld [vmem:[%s1171] sm:$0xf]
        %v1173 = vld [vmem:[%s1171 + $0x4] sm:$0xf]
        %v1174 = vld [vmem:[%s1171 + $0x8] sm:$0xf]
        %v1175 = vld [vmem:[%s1171 + $0xc] sm:$0xf]
        %v1176 = vld [vmem:[%s1171 + $0x10] sm:$0xf]
        %v1177 = vld [vmem:[%s1171 + $0x14] sm:$0xf]
        %v1178 = vld [vmem:[%s1171 + $0x18] sm:$0xf]
        %v1179 = vld [vmem:[%s1171 + $0x1c] sm:$0xf]
        %v1180 = vld [vmem:[%s1171 + $0x20] sm:$0xf]
        %v1181 = vld [vmem:[%s1171 + $0x24] sm:$0xf]
        %v1182 = vld [vmem:[%s1171 + $0x28] sm:$0xf]
        %v1183 = vld [vmem:[%s1171 + $0x2c] sm:$0xf]
        %v1184 = vld [vmem:[%s1171 + $0x30] sm:$0xf]
        %v1185 = vld [vmem:[%s1171 + $0x34] sm:$0xf]
        %v1186 = vld [vmem:[%s1171 + $0x38] sm:$0xf]
        %v1187 = vld [vmem:[%s1171 + $0x3c] sm:$0xf]
        %v1204 = vunpack.c.l.b16 %v1172
        %v1205 = vunpack.c.l.b16 %v1173
        %v1206 = vunpack.c.l.b16 %v1174
        %v1207 = vunpack.c.l.b16 %v1175
        %v1208 = vunpack.c.l.b16 %v1176
        %v1209 = vunpack.c.l.b16 %v1177
        %v1210 = vunpack.c.l.b16 %v1178
        %v1211 = vunpack.c.l.b16 %v1179
        %v1212 = vunpack.c.l.b16 %v1180
        %v1213 = vunpack.c.l.b16 %v1181
        %v1214 = vunpack.c.l.b16 %v1182
        %v1215 = vunpack.c.l.b16 %v1183
        %v1216 = vunpack.c.l.b16 %v1184
        %v1217 = vunpack.c.l.b16 %v1185
        %v1218 = vunpack.c.l.b16 %v1186
        %v1219 = vunpack.c.l.b16 %v1187
        %v1220 = vpack.c.b16 %v1205, %v1204
        %v1221 = vpack.c.b16 %v1207, %v1206
        %v1222 = vpack.c.b16 %v1209, %v1208
        %v1223 = vpack.c.b16 %v1211, %v1210
        %v1224 = vpack.c.b16 %v1213, %v1212
        %v1225 = vpack.c.b16 %v1215, %v1214
        %v1226 = vpack.c.b16 %v1217, %v1216
        %v1227 = vpack.c.b16 %v1219, %v1218
        %1236 = vmatprep.subr.bf16.mxu0 0
        %1237 = vmatpush1.bf16.msra.mxu0 %v1227
        %1238 = vmatprep.subr.bf16.mxu0 0
        %1239 = vmatpush1.bf16.msra.mxu0 %v1226
        %1240 = vmatprep.subr.bf16.mxu0 0
        %1241 = vmatpush1.bf16.msra.mxu0 %v1225
        %1242 = vmatprep.subr.bf16.mxu0 0
        %1243 = vmatpush1.bf16.msra.mxu0 %v1224
        %1244 = vmatprep.subr.bf16.mxu0 0
        %1245 = vmatpush1.bf16.msra.mxu0 %v1223
        %1246 = vmatprep.subr.bf16.mxu0 0
        %1247 = vmatpush1.bf16.msra.mxu0 %v1222
        %1248 = vmatprep.subr.bf16.mxu0 0
        %1249 = vmatpush1.bf16.msra.mxu0 %v1221
        %1250 = vmatprep.subr.bf16.mxu0 0
        %1251 = vmatpush1.bf16.msra.mxu0 %v1220
        %1252 = vmatprep.subr.bf16.mxu0 0
        %1253 = vmatpush2.bf16.msra.mxu0 0
        %1254 = vmatprep.subr.bf16.mxu0 0
        %1255 = vmatpush2.bf16.msra.mxu0 0
        %1256 = vmatprep.subr.bf16.mxu0 0
        %1257 = vmatpush2.bf16.msra.mxu0 0
        %1258 = vmatprep.subr.bf16.mxu0 0
        %1259 = vmatpush2.bf16.msra.mxu0 0
        %1260 = vmatprep.subr.bf16.mxu0 0
        %1261 = vmatpush2.bf16.msra.mxu0 0
        %1262 = vmatprep.subr.bf16.mxu0 0
        %1263 = vmatpush2.bf16.msra.mxu0 0
        %1264 = vmatprep.subr.bf16.mxu0 0
        %1265 = vmatpush2.bf16.msra.mxu0 0
        %1266 = vmatprep.subr.bf16.mxu0 0
        %1267 = vmatpush2.bf16.msra.mxu0 0
        %1268 = vmatprep.mubr.bf16.mxu0 0
        %1269 = vmatmul.mubr.bf16.gmra.mxu0 %v632
        %v1270 = vpop.f32.mrf.mxu0
        %v1271 = vadd.f32 0.0, %v1270
        %v1272 = vpop.f32.mrf.mxu0
        %v1273 = vpop.f32.mrf.mxu0
        %v1274 = vadd.f32 0.0, %v1273
        %v1275 = vpop.f32.mrf.mxu0
        %1276 = vdwg.mxu0
        %v1277 = vadd.f32 %v1169, %v1271
        %v1278 = vadd.f32 %v1170, %v1274
        %s1279 = scalar_lea.vmem %s4, 384
        %v1280 = vld [vmem:[%s1279] sm:$0xf]
        %v1281 = vld [vmem:[%s1279 + $0x4] sm:$0xf]
        %v1282 = vld [vmem:[%s1279 + $0x8] sm:$0xf]
        %v1283 = vld [vmem:[%s1279 + $0xc] sm:$0xf]
        %v1284 = vld [vmem:[%s1279 + $0x10] sm:$0xf]
        %v1285 = vld [vmem:[%s1279 + $0x14] sm:$0xf]
        %v1286 = vld [vmem:[%s1279 + $0x18] sm:$0xf]
        %v1287 = vld [vmem:[%s1279 + $0x1c] sm:$0xf]
        %v1288 = vld [vmem:[%s1279 + $0x20] sm:$0xf]
        %v1289 = vld [vmem:[%s1279 + $0x24] sm:$0xf]
        %v1290 = vld [vmem:[%s1279 + $0x28] sm:$0xf]
        %v1291 = vld [vmem:[%s1279 + $0x2c] sm:$0xf]
        %v1292 = vld [vmem:[%s1279 + $0x30] sm:$0xf]
        %v1293 = vld [vmem:[%s1279 + $0x34] sm:$0xf]
        %v1294 = vld [vmem:[%s1279 + $0x38] sm:$0xf]
        %v1295 = vld [vmem:[%s1279 + $0x3c] sm:$0xf]
        %v1312 = vunpack.c.l.b16 %v1280
        %v1313 = vunpack.c.l.b16 %v1281
        %v1314 = vunpack.c.l.b16 %v1282
        %v1315 = vunpack.c.l.b16 %v1283
        %v1316 = vunpack.c.l.b16 %v1284
        %v1317 = vunpack.c.l.b16 %v1285
        %v1318 = vunpack.c.l.b16 %v1286
        %v1319 = vunpack.c.l.b16 %v1287
        %v1320 = vunpack.c.l.b16 %v1288
        %v1321 = vunpack.c.l.b16 %v1289
        %v1322 = vunpack.c.l.b16 %v1290
        %v1323 = vunpack.c.l.b16 %v1291
        %v1324 = vunpack.c.l.b16 %v1292
        %v1325 = vunpack.c.l.b16 %v1293
        %v1326 = vunpack.c.l.b16 %v1294
        %v1327 = vunpack.c.l.b16 %v1295
        %v1328 = vpack.c.b16 %v1313, %v1312
        %v1329 = vpack.c.b16 %v1315, %v1314
        %v1330 = vpack.c.b16 %v1317, %v1316
        %v1331 = vpack.c.b16 %v1319, %v1318
        %v1332 = vpack.c.b16 %v1321, %v1320
        %v1333 = vpack.c.b16 %v1323, %v1322
        %v1334 = vpack.c.b16 %v1325, %v1324
        %v1335 = vpack.c.b16 %v1327, %v1326
        %1344 = vmatprep.subr.bf16.mxu0 0
        %1345 = vmatpush1.bf16.msra.mxu0 %v1335
        %1346 = vmatprep.subr.bf16.mxu0 0
        %1347 = vmatpush1.bf16.msra.mxu0 %v1334
        %1348 = vmatprep.subr.bf16.mxu0 0
        %1349 = vmatpush1.bf16.msra.mxu0 %v1333
        %1350 = vmatprep.subr.bf16.mxu0 0
        %1351 = vmatpush1.bf16.msra.mxu0 %v1332
        %1352 = vmatprep.subr.bf16.mxu0 0
        %1353 = vmatpush1.bf16.msra.mxu0 %v1331
        %1354 = vmatprep.subr.bf16.mxu0 0
        %1355 = vmatpush1.bf16.msra.mxu0 %v1330
        %1356 = vmatprep.subr.bf16.mxu0 0
        %1357 = vmatpush1.bf16.msra.mxu0 %v1329
        %1358 = vmatprep.subr.bf16.mxu0 0
        %1359 = vmatpush1.bf16.msra.mxu0 %v1328
        %1360 = vmatprep.subr.bf16.mxu0 0
        %1361 = vmatpush2.bf16.msra.mxu0 0
        %1362 = vmatprep.subr.bf16.mxu0 0
        %1363 = vmatpush2.bf16.msra.mxu0 0
        %1364 = vmatprep.subr.bf16.mxu0 0
        %1365 = vmatpush2.bf16.msra.mxu0 0
        %1366 = vmatprep.subr.bf16.mxu0 0
        %1367 = vmatpush2.bf16.msra.mxu0 0
        %1368 = vmatprep.subr.bf16.mxu0 0
        %1369 = vmatpush2.bf16.msra.mxu0 0
        %1370 = vmatprep.subr.bf16.mxu0 0
        %1371 = vmatpush2.bf16.msra.mxu0 0
        %1372 = vmatprep.subr.bf16.mxu0 0
        %1373 = vmatpush2.bf16.msra.mxu0 0
        %1374 = vmatprep.subr.bf16.mxu0 0
        %1375 = vmatpush2.bf16.msra.mxu0 0
        %1376 = vmatprep.mubr.bf16.mxu0 0
        %1377 = vmatmul.mubr.bf16.gmra.mxu0 %v633
        %v1378 = vpop.f32.mrf.mxu0
        %v1379 = vadd.f32 0.0, %v1378
        %v1380 = vpop.f32.mrf.mxu0
        %v1381 = vpop.f32.mrf.mxu0
        %v1382 = vadd.f32 0.0, %v1381
        %v1383 = vpop.f32.mrf.mxu0
        %1384 = vdwg.mxu0
        %v1385 = vadd.f32 %v1277, %v1379
        %v1386 = vadd.f32 %v1278, %v1382
        %s1387 = scalar_lea.vmem %s4, 448
        %v1388 = vld [vmem:[%s1387] sm:$0xf]
        %v1389 = vld [vmem:[%s1387 + $0x4] sm:$0xf]
        %v1390 = vld [vmem:[%s1387 + $0x8] sm:$0xf]
        %v1391 = vld [vmem:[%s1387 + $0xc] sm:$0xf]
        %v1392 = vld [vmem:[%s1387 + $0x10] sm:$0xf]
        %v1393 = vld [vmem:[%s1387 + $0x14] sm:$0xf]
        %v1394 = vld [vmem:[%s1387 + $0x18] sm:$0xf]
        %v1395 = vld [vmem:[%s1387 + $0x1c] sm:$0xf]
        %v1396 = vld [vmem:[%s1387 + $0x20] sm:$0xf]
        %v1397 = vld [vmem:[%s1387 + $0x24] sm:$0xf]
        %v1398 = vld [vmem:[%s1387 + $0x28] sm:$0xf]
        %v1399 = vld [vmem:[%s1387 + $0x2c] sm:$0xf]
        %v1400 = vld [vmem:[%s1387 + $0x30] sm:$0xf]
        %v1401 = vld [vmem:[%s1387 + $0x34] sm:$0xf]
        %v1402 = vld [vmem:[%s1387 + $0x38] sm:$0xf]
        %v1403 = vld [vmem:[%s1387 + $0x3c] sm:$0xf]
        %v1420 = vunpack.c.l.b16 %v1388
        %v1421 = vunpack.c.l.b16 %v1389
        %v1422 = vunpack.c.l.b16 %v1390
        %v1423 = vunpack.c.l.b16 %v1391
        %v1424 = vunpack.c.l.b16 %v1392
        %v1425 = vunpack.c.l.b16 %v1393
        %v1426 = vunpack.c.l.b16 %v1394
        %v1427 = vunpack.c.l.b16 %v1395
        %v1428 = vunpack.c.l.b16 %v1396
        %v1429 = vunpack.c.l.b16 %v1397
        %v1430 = vunpack.c.l.b16 %v1398
        %v1431 = vunpack.c.l.b16 %v1399
        %v1432 = vunpack.c.l.b16 %v1400
        %v1433 = vunpack.c.l.b16 %v1401
        %v1434 = vunpack.c.l.b16 %v1402
        %v1435 = vunpack.c.l.b16 %v1403
        %v1436 = vpack.c.b16 %v1421, %v1420
        %v1437 = vpack.c.b16 %v1423, %v1422
        %v1438 = vpack.c.b16 %v1425, %v1424
        %v1439 = vpack.c.b16 %v1427, %v1426
        %v1440 = vpack.c.b16 %v1429, %v1428
        %v1441 = vpack.c.b16 %v1431, %v1430
        %v1442 = vpack.c.b16 %v1433, %v1432
        %v1443 = vpack.c.b16 %v1435, %v1434
        %1452 = vmatprep.subr.bf16.mxu0 0
        %1453 = vmatpush1.bf16.msra.mxu0 %v1443
        %1454 = vmatprep.subr.bf16.mxu0 0
        %1455 = vmatpush1.bf16.msra.mxu0 %v1442
        %1456 = vmatprep.subr.bf16.mxu0 0
        %1457 = vmatpush1.bf16.msra.mxu0 %v1441
        %1458 = vmatprep.subr.bf16.mxu0 0
        %1459 = vmatpush1.bf16.msra.mxu0 %v1440
        %1460 = vmatprep.subr.bf16.mxu0 0
        %1461 = vmatpush1.bf16.msra.mxu0 %v1439
        %1462 = vmatprep.subr.bf16.mxu0 0
        %1463 = vmatpush1.bf16.msra.mxu0 %v1438
        %1464 = vmatprep.subr.bf16.mxu0 0
        %1465 = vmatpush1.bf16.msra.mxu0 %v1437
        %1466 = vmatprep.subr.bf16.mxu0 0
        %1467 = vmatpush1.bf16.msra.mxu0 %v1436
        %1468 = vmatprep.subr.bf16.mxu0 0
        %1469 = vmatpush2.bf16.msra.mxu0 0
        %1470 = vmatprep.subr.bf16.mxu0 0
        %1471 = vmatpush2.bf16.msra.mxu0 0
        %1472 = vmatprep.subr.bf16.mxu0 0
        %1473 = vmatpush2.bf16.msra.mxu0 0
        %1474 = vmatprep.subr.bf16.mxu0 0
        %1475 = vmatpush2.bf16.msra.mxu0 0
        %1476 = vmatprep.subr.bf16.mxu0 0
        %1477 = vmatpush2.bf16.msra.mxu0 0
        %1478 = vmatprep.subr.bf16.mxu0 0
        %1479 = vmatpush2.bf16.msra.mxu0 0
        %1480 = vmatprep.subr.bf16.mxu0 0
        %1481 = vmatpush2.bf16.msra.mxu0 0
        %1482 = vmatprep.subr.bf16.mxu0 0
        %1483 = vmatpush2.bf16.msra.mxu0 0
        %1484 = vmatprep.mubr.bf16.mxu0 0
        %1485 = vmatmul.mubr.bf16.gmra.mxu0 %v634
        %v1486 = vpop.f32.mrf.mxu0
        %v1487 = vadd.f32 0.0, %v1486
        %v1488 = vpop.f32.mrf.mxu0
        %v1489 = vpop.f32.mrf.mxu0
        %v1490 = vadd.f32 0.0, %v1489
        %v1491 = vpop.f32.mrf.mxu0
        %1492 = vdwg.mxu0
        %v1493 = vadd.f32 %v1385, %v1487
        %v1494 = vadd.f32 %v1386, %v1490
        %s1495 = scalar_lea.vmem %s4, 512
        %v1496 = vld [vmem:[%s1495] sm:$0xf]
        %v1497 = vld [vmem:[%s1495 + $0x4] sm:$0xf]
        %v1498 = vld [vmem:[%s1495 + $0x8] sm:$0xf]
        %v1499 = vld [vmem:[%s1495 + $0xc] sm:$0xf]
        %v1500 = vld [vmem:[%s1495 + $0x10] sm:$0xf]
        %v1501 = vld [vmem:[%s1495 + $0x14] sm:$0xf]
        %v1502 = vld [vmem:[%s1495 + $0x18] sm:$0xf]
        %v1503 = vld [vmem:[%s1495 + $0x1c] sm:$0xf]
        %v1504 = vld [vmem:[%s1495 + $0x20] sm:$0xf]
        %v1505 = vld [vmem:[%s1495 + $0x24] sm:$0xf]
        %v1506 = vld [vmem:[%s1495 + $0x28] sm:$0xf]
        %v1507 = vld [vmem:[%s1495 + $0x2c] sm:$0xf]
        %v1508 = vld [vmem:[%s1495 + $0x30] sm:$0xf]
        %v1509 = vld [vmem:[%s1495 + $0x34] sm:$0xf]
        %v1510 = vld [vmem:[%s1495 + $0x38] sm:$0xf]
        %v1511 = vld [vmem:[%s1495 + $0x3c] sm:$0xf]
        %v1528 = vunpack.c.l.b16 %v1496
        %v1529 = vunpack.c.l.b16 %v1497
        %v1530 = vunpack.c.l.b16 %v1498
        %v1531 = vunpack.c.l.b16 %v1499
        %v1532 = vunpack.c.l.b16 %v1500
        %v1533 = vunpack.c.l.b16 %v1501
        %v1534 = vunpack.c.l.b16 %v1502
        %v1535 = vunpack.c.l.b16 %v1503
        %v1536 = vunpack.c.l.b16 %v1504
        %v1537 = vunpack.c.l.b16 %v1505
        %v1538 = vunpack.c.l.b16 %v1506
        %v1539 = vunpack.c.l.b16 %v1507
        %v1540 = vunpack.c.l.b16 %v1508
        %v1541 = vunpack.c.l.b16 %v1509
        %v1542 = vunpack.c.l.b16 %v1510
        %v1543 = vunpack.c.l.b16 %v1511
        %v1544 = vpack.c.b16 %v1529, %v1528
        %v1545 = vpack.c.b16 %v1531, %v1530
        %v1546 = vpack.c.b16 %v1533, %v1532
        %v1547 = vpack.c.b16 %v1535, %v1534
        %v1548 = vpack.c.b16 %v1537, %v1536
        %v1549 = vpack.c.b16 %v1539, %v1538
        %v1550 = vpack.c.b16 %v1541, %v1540
        %v1551 = vpack.c.b16 %v1543, %v1542
        %1560 = vmatprep.subr.bf16.mxu0 0
        %1561 = vmatpush1.bf16.msra.mxu0 %v1551
        %1562 = vmatprep.subr.bf16.mxu0 0
        %1563 = vmatpush1.bf16.msra.mxu0 %v1550
        %1564 = vmatprep.subr.bf16.mxu0 0
        %1565 = vmatpush1.bf16.msra.mxu0 %v1549
        %1566 = vmatprep.subr.bf16.mxu0 0
        %1567 = vmatpush1.bf16.msra.mxu0 %v1548
        %1568 = vmatprep.subr.bf16.mxu0 0
        %1569 = vmatpush1.bf16.msra.mxu0 %v1547
        %1570 = vmatprep.subr.bf16.mxu0 0
        %1571 = vmatpush1.bf16.msra.mxu0 %v1546
        %1572 = vmatprep.subr.bf16.mxu0 0
        %1573 = vmatpush1.bf16.msra.mxu0 %v1545
        %1574 = vmatprep.subr.bf16.mxu0 0
        %1575 = vmatpush1.bf16.msra.mxu0 %v1544
        %1576 = vmatprep.subr.bf16.mxu0 0
        %1577 = vmatpush2.bf16.msra.mxu0 0
        %1578 = vmatprep.subr.bf16.mxu0 0
        %1579 = vmatpush2.bf16.msra.mxu0 0
        %1580 = vmatprep.subr.bf16.mxu0 0
        %1581 = vmatpush2.bf16.msra.mxu0 0
        %1582 = vmatprep.subr.bf16.mxu0 0
        %1583 = vmatpush2.bf16.msra.mxu0 0
        %1584 = vmatprep.subr.bf16.mxu0 0
        %1585 = vmatpush2.bf16.msra.mxu0 0
        %1586 = vmatprep.subr.bf16.mxu0 0
        %1587 = vmatpush2.bf16.msra.mxu0 0
        %1588 = vmatprep.subr.bf16.mxu0 0
        %1589 = vmatpush2.bf16.msra.mxu0 0
        %1590 = vmatprep.subr.bf16.mxu0 0
        %1591 = vmatpush2.bf16.msra.mxu0 0
        %1592 = vmatprep.mubr.bf16.mxu0 0
        %1593 = vmatmul.mubr.bf16.gmra.mxu0 %v635
        %v1594 = vpop.f32.mrf.mxu0
        %v1595 = vadd.f32 0.0, %v1594
        %v1596 = vpop.f32.mrf.mxu0
        %v1597 = vpop.f32.mrf.mxu0
        %v1598 = vadd.f32 0.0, %v1597
        %v1599 = vpop.f32.mrf.mxu0
        %1600 = vdwg.mxu0
        %v1601 = vadd.f32 %v1493, %v1595
        %v1602 = vadd.f32 %v1494, %v1598
        %v1603 = vld [vmem:[%s5] sm:$0x1]
        %v1605 = vlaneseq
        %v1606 = vshrl.u32 %v1605, 7
        %v1607 = vsub.s32 0, %v1606
        %v1608 = vrot.slane %v1603, %v1607
        %v1610 = vadd.f32 %v1601, %v1608
        %v1611 = vadd.f32 %v1602, %v1608
        %1612 = vst [vmem:[%s244] sm:$0xff] %v1610
        %1613 = vst [vmem:[%s244 + $0x8] sm:$0xff] %v1611
        %s1614 = sand.u32 %s159, 1
        %s1615 = scalar_lea.sflag [#allocation3], %s1614
        %s1616 = sand.u32 %s159, 1
        %s1617 = smul.addr %s1616, 16
        %s1618 = scalar_lea.vmem [#allocation2], %s1617
        // Predicated region
        $region45: #{encoder_forward.1} parent=43 // pred_check
          %p1619 = pneg %p169
        $region46: #{encoder_forward.1} parent=43 // pred_check_branch
          %1621 = sbr.rel (%p1619) target = $region48
        $region47: #{encoder_forward.1} parent=43 // pred_region
          %s1623 = ssub.s32 256, 256
          %1624 = vsyncadd %s1615, %s1623
          %s1625 = smul.addr %s20, 2
          %s1626 = smul.addr %s1625, 128
          %s1627 = scalar_lea.hbm %s6, %s1626
          %s1628 = sshll.u32 %s1618, 4
          %s1629 = int_to_ptr.vmem [resolvable:$true] %s1628
          %1634 = dma.vmem_to_hbm [thread:$0]  %s1629, 256, %s1627, %s1615, 128, 128, 8
        $region48: #{encoder_forward.1} parent=43 // pred_fallthru
          _
      $region44: #{encoder_forward.1} parent=5 // pred_fallthru
        _
      %p1635 = scmp.le.s32.totalorder 2, %s15
      // Predicated region
      $region49: #{encoder_forward.1} parent=5 // pred_check
        %p1636 = pneg %p1635
      $region50: #{encoder_forward.1} parent=5 // pred_check_branch
        %1638 = sbr.rel (%p1636) target = $region52
      $region51: #{encoder_forward.1} parent=5 // pred_region
        %s1639 = ssub.s32 %s15, 2
        // Predicated region
        $region53: #{encoder_forward.1} parent=51 // pred_check
          %p1640 = pneg %p175
        $region54: #{encoder_forward.1} parent=51 // pred_check_branch
          %1642 = sbr.rel (%p1640) target = $region56
        $region55: #{encoder_forward.1} parent=51 // pred_region
          %s1643 = sand.u32 %s160, 1
          %s1644 = scalar_lea.sflag [#allocation3], %s1643
          %s1645 = sand.u32 %s160, 1
          %s1646 = smul.addr %s1645, 16
          %s1647 = scalar_lea.vmem [#allocation2], %s1646
          %1648 = dma.done %s1644, 256
        $region56: #{encoder_forward.1} parent=51 // pred_fallthru
          _
      $region52: #{encoder_forward.1} parent=5 // pred_fallthru
        _
    $region6: #{encoder_forward.1} parent=1 // loop_footer
      %s19 = sadd.s32 1, %s15
    $region7: #{encoder_forward.1} parent=1 // loop_footer_branch
      %14 = sbr.rel target = $region3
    $region8: #{encoder_forward.1} parent=1 // loop_exit
      _
    %1649 = vsyncpa [#allocation3], 1
    %s1650 = scalar_lea.sflag [#allocation3], 1
    %1651 = vsyncpa %s1650, 1

</llo_original>
